<compile_context>
chip_gen: v6e
topology: v6e:2x2x1
jax: 0.10.0
libtpu: 0.0.40
codegen_flags: <defaults>
</compile_context>

<pallas_src>
import functools

import numpy as np
import jax
import jax.numpy as jnp
from jax.experimental import pallas as pl
from jax.experimental.pallas import tpu as pltpu

NEG_SLOPE = 0.01   # nn.LeakyReLU default
EPS = 1e-6


def _vmem():
    return pl.BlockSpec(memory_space=pltpu.MemorySpace.VMEM)


def _round_up(x, m):
    return (x + m - 1) // m * m


# --------------------------------------------------------------------------
# Parameter preparation: fold im2col / stride / padding into dense matrices,
# then pack everything into one bf16 weight slab + one f32 bias slab.
# Done once, outside the kernel and outside jit (pure numpy on tiny tensors).
# --------------------------------------------------------------------------
def _conv_as_matmul(w, b, hin, win, stride, padding, in_order="hwc"):
    """Unroll conv2d into a dense matmul:  out_flat = in_flat @ Wmat + bias.

    Input rows follow `in_order` flattening of (H, W, Cin) ("hwc") or
    (Cin, H, W) ("chw" == torch NCHW flatten); output columns are always
    (OH, OW, Cout)-flattened.  Returns numpy arrays.
    """
    w = np.asarray(w, np.float32)      # (Cout, Cin, KH, KW)
    b = np.asarray(b, np.float32)
    cout, cin, kh, kw = w.shape
    oh = (hin + 2 * padding - kh) // stride + 1
    ow = (win + 2 * padding - kw) // stride + 1
    if in_order == "hwc":
        big = np.zeros((hin, win, cin, oh, ow, cout), np.float32)
    else:
        big = np.zeros((cin, hin, win, oh, ow, cout), np.float32)
    wt = np.transpose(w, (2, 3, 1, 0))  # (KH, KW, Cin, Cout)
    for dh in range(kh):
        for dw in range(kw):
            for i in range(oh):
                h = i * stride + dh - padding
                if h < 0 or h >= hin:
                    continue
                for j in range(ow):
                    v = j * stride + dw - padding
                    if v < 0 or v >= win:
                        continue
                    if in_order == "hwc":
                        big[h, v, :, i, j, :] = wt[dh, dw]
                    else:
                        big[:, h, v, i, j, :] = wt[dh, dw]
    wmat = big.reshape(hin * win * cin, oh * ow * cout)
    bias = np.tile(b, oh * ow).reshape(1, oh * ow * cout)
    return wmat, bias, (oh, ow)


def _pack_weights(items, dtype=jnp.bfloat16, row_align=16, lanes=128):
    """Pack 2-D matrices into one (rows, 128) slab; row starts 16-aligned."""
    offs = {}
    rows = 0
    for name, arr in items:
        r, c = arr.shape
        assert c <= lanes
        offs[name] = (rows, r, c)
        rows = _round_up(rows + r, row_align)
    slab = np.zeros((max(rows, row_align), lanes), np.float32)
    for name, arr in items:
        r0, r, c = offs[name]
        slab[r0:r0 + r, :c] = arr
    return jnp.asarray(slab, dtype), offs


def _pack_biases(items, lanes=128):
    """One bias row per slab row (f32 for exact bias adds)."""
    offs = {}
    slab = np.zeros((_round_up(len(items), 8), lanes), np.float32)
    for k, (name, arr) in enumerate(items):
        vec = np.asarray(arr, np.float32).reshape(-1)
        slab[k, :vec.shape[0]] = vec
        offs[name] = (k, vec.shape[0])
    return jnp.asarray(slab, jnp.float32), offs


def prepare_params(params, num_classes, img_channels, h, w):
    f0 = int(params["conv1_w"].shape[0])          # filters[0]
    f1 = int(params["l1b0"]["w1"].shape[0])       # filters[1]
    assert int(params["conv1_w"].shape[1]) == num_classes + img_channels

    # conv1 (7x7/s2/p3) on the NCHW-flattened cat([logits, image], dim=1):
    # one dense matmul, channel concat folded into the row ordering.
    w1, b1, (h1, w1o) = _conv_as_matmul(params["conv1_w"], params["conv1_b"],
                                        h, w, 2, 3, in_order="chw")

    hp = (h1 + 2 - 3) // 2 + 1                    # 3x3/s2/p1 max-pool output
    wp = (w1o + 2 - 3) // 2 + 1

    def block_mats(prm, hin, win, stride):
        wa, ba, (ho, wo) = _conv_as_matmul(prm["w1"], prm["b1"], hin, win, stride, 1)
        wb, bb, _ = _conv_as_matmul(prm["w2"], prm["b2"], ho, wo, 1, 1)
        return (wa, ba, wb, bb), (ho, wo)

    (p0w1, p0b1, p0w2, p0b2), _ = block_mats(params["l0b0"], hp, wp, 1)
    (p1w1, p1b1, p1w2, p1b2), _ = block_mats(params["l0b1"], hp, wp, 1)
    (q0w1, q0b1, q0w2, q0b2), (h2, w2) = block_mats(params["l1b0"], hp, wp, 2)
    q0wd, q0bd, _ = _conv_as_matmul(params["l1ds"]["w"], params["l1ds"]["b"],
                                    hp, wp, 2, 0)
    (q1w1, q1b1, q1w2, q1b2), _ = block_mats(params["l1b1"], h2, w2, 1)

    # Fold AdaptiveAvgPool2d((1,1)) into fc: pooled@fc == x_flat @ (tile(fc)/S)
    spatial = h2 * w2
    fc_w = np.asarray(params["fc_w"], np.float32)          # (c2, nc)
    fc_exp = np.tile(fc_w, (spatial, 1)) / float(spatial)  # (spatial*c2, nc)
    fc_b = np.asarray(params["fc_b"], np.float32).reshape(1, -1)

    wslab, woff = _pack_weights([
        ("w1", w1),
        ("p0w1", p0w1), ("p0w2", p0w2), ("p1w1", p1w1), ("p1w2", p1w2),
        ("q0w1", q0w1), ("q0w2", q0w2), ("q0wd", q0wd),
        ("q1w1", q1w1), ("q1w2", q1w2),
        ("fc", fc_exp),
    ])
    bslab, boff = _pack_biases([
        ("b1", b1),
        ("p0b1", p0b1), ("p0b2", p0b2), ("p1b1", p1b1), ("p1b2", p1b2),
        ("q0b1", q0b1), ("q0b2", q0b2), ("q0bd", q0bd),
        ("q1b1", q1b1), ("q1b2", q1b2),
        ("fcb", fc_b),
    ])

    geom = dict(H=h, W=w, num_classes=num_classes,
                h1=h1, w1=w1o, c1=f0, hp=hp, wp=wp, h2=h2, w2=w2, c2=f1)
    return (wslab, bslab), dict(geom=geom, woff=woff, boff=boff)


# --------------------------------------------------------------------------
# Fully fused forward kernel (no grid: whole problem resident in VMEM)
# --------------------------------------------------------------------------
def _scts_kernel(xin_ref, wslab_ref, bslab_ref, out_ref,
                 *, geom, woff, boff, eps, neg_slope):
    f32 = jnp.float32
    bf16 = jnp.bfloat16

    def wmat(name):                        # static slab carve-out (view+load)
        r0, nr, nc_ = woff[name]
        return wslab_ref[r0:r0 + nr, :nc_]

    def bias(name):
        k, nc_ = boff[name]
        return bslab_ref[k:k + 1, :nc_]

    def lrelu(v):                          # LeakyReLU(0.01) == max(x, 0.01*x)
        return jnp.maximum(v, neg_slope * v)

    def mm(a, wname, bname):               # bf16 MXU matmul, f32 acc + f32 bias
        return jnp.dot(a.astype(bf16), wmat(wname),
                       preferred_element_type=f32) + bias(bname)

    H, W, C = geom["H"], geom["W"], geom["num_classes"]
    xin = xin_ref[...]                     # (B, (C+Ci)*H*W), NCHW-flat concat

    # ---- conv1 (7x7/s2/p3, bias) + LeakyReLU: one im2col matmul ----
    x = lrelu(mm(xin, "w1", "b1"))         # (B, h1*w1*c1), (h,w,c)-flat

    # ---- max_pool2d(3, stride=2, padding=1): register maxima + lane concat ----
    h1, w1, c1 = geom["h1"], geom["w1"], geom["c1"]
    hp, wp = geom["hp"], geom["wp"]
    pieces = []
    for i in range(hp):
        for j in range(wp):
            acc = None
            for di in range(3):
                hh = i * 2 + di - 1
                if hh < 0 or hh >= h1:
                    continue
                for dj in range(3):
                    ww = j * 2 + dj - 1
                    if ww < 0 or ww >= w1:
                        continue
                    s = x[:, (hh * w1 + ww) * c1:(hh * w1 + ww + 1) * c1]
                    acc = s if acc is None else jnp.maximum(acc, s)
            pieces.append(acc)
    x = pieces[0] if len(pieces) == 1 else jnp.concatenate(pieces, axis=1)
    # x: (B, hp*wp*c1), stays in vregs

    # ---- layer_0: two BasicBlocks (stride 1, identity residual) ----
    h = lrelu(mm(x, "p0w1", "p0b1"))
    x = lrelu(mm(h, "p0w2", "p0b2") + x)
    h = lrelu(mm(x, "p1w1", "p1b1"))
    x = lrelu(mm(h, "p1w2", "p1b2") + x)

    # ---- layer_1: BasicBlock(stride 2, 1x1/s2 downsample) + BasicBlock ----
    h = lrelu(mm(x, "q0w1", "q0b1"))
    x = lrelu(mm(h, "q0w2", "q0b2") + mm(x, "q0wd", "q0bd"))
    h = lrelu(mm(x, "q1w1", "q1b1"))
    x = lrelu(mm(h, "q1w2", "q1b2") + x)   # (B, h2*w2*c2)

    # ---- AdaptiveAvgPool2d((1,1)) + flatten + fc (pool folded into fc) ----
    t = mm(x, "fc", "fcb")                 # (B, num_classes)

    # ---- temps = |t| + eps (temp_range=None); out = logits / temps.
    # PyTorch broadcasts (B,C,H,W)/(B,C) by trailing-dim alignment, i.e. temps
    # is indexed by (h, w).  Build the (1, C*H*W) multiplier entirely in
    # registers (lane concat), then do one lane-dense full-width store. ----
    inv_t = pl.reciprocal(jnp.abs(t) + eps, approx=False)        # (H, W)
    flat = jnp.concatenate([inv_t[i:i + 1, :] for i in range(H)], axis=1)  # (1, H*W)
    mult = jnp.concatenate([flat] * C, axis=1)                   # (1, C*H*W)
    logits = xin[:, :C * H * W]
    out_ref[...] = logits * mult


# --------------------------------------------------------------------------
# Wrapper
# --------------------------------------------------------------------------
def scts_forward(wslab, bslab, logits, image, *, geom, woff, boff, eps=EPS):
    B, C, H, W = logits.shape
    assert (C, H, W) == (geom["num_classes"], geom["H"], geom["W"])
    # Required for PyTorch's trailing-dim broadcast of (B,C,H,W) / (B,C):
    assert B == H and C == W
    ci = image.shape[1]
    # torch.cat([logits, image], dim=1) folded into a single flat input row.
    xin = jnp.concatenate(
        [logits.reshape(B, C * H * W).astype(jnp.float32),
         image.reshape(B, ci * H * W).astype(jnp.float32)], axis=1)

    kernel = functools.partial(_scts_kernel, geom=geom, woff=woff, boff=boff,
                               eps=eps, neg_slope=NEG_SLOPE)
    out_flat = pl.pallas_call(
        kernel,
        out_shape=jax.ShapeDtypeStruct((B, C * H * W), jnp.float32),
        in_specs=[_vmem(), _vmem(), _vmem()],
        out_specs=_vmem(),
    )(xin, wslab, bslab)
    return out_flat.reshape(B, C, H, W)


# --------------------------------------------------------------------------
# Parameter init (deterministic, PyTorch-like uniform(-1/sqrt(fan_in), ...))
# --------------------------------------------------------------------------
def _conv_init(key, cout, cin, kh, kw):
    k1, k2 = jax.random.split(key)
    bound = 1.0 / float(cin * kh * kw) ** 0.5
    w = jax.random.uniform(k1, (cout, cin, kh, kw), jnp.float32, -bound, bound)
    b = jax.random.uniform(k2, (cout,), jnp.float32, -bound, bound)
    return w, b


def init_params(key, img_channels, num_classes, filters):
    in_ch = num_classes + img_channels       # use_image=True
    keys = iter(jax.random.split(key, 32))
    p = {}
    p["conv1_w"], p["conv1_b"] = _conv_init(next(keys), filters[0], in_ch, 7, 7)

    def block(cin, cout):
        w1, b1 = _conv_init(next(keys), cout, cin, 3, 3)
        w2, b2 = _conv_init(next(keys), cout, cout, 3, 3)
        return {"w1": w1, "b1": b1, "w2": w2, "b2": b2}

    # layer_0: stride 1, no downsample (in_planes == filters[0])
    p["l0b0"] = block(filters[0], filters[0])
    p["l0b1"] = block(filters[0], filters[0])
    # layer_1: stride 2, 1x1 downsample
    p["l1b0"] = block(filters[0], filters[1])
    dw, db = _conv_init(next(keys), filters[1], filters[0], 1, 1)
    p["l1ds"] = {"w": dw, "b": db}
    p["l1b1"] = block(filters[1], filters[1])
    # fc: Linear(filters[-1], num_classes), stored as (in, out)
    bound = 1.0 / float(filters[-1]) ** 0.5
    k1, k2 = jax.random.split(next(keys))
    p["fc_w"] = jax.random.uniform(k1, (filters[-1], num_classes), jnp.float32,
                                   -bound, bound)
    p["fc_b"] = jax.random.uniform(k2, (1, num_classes), jnp.float32,
                                   -bound, bound)
    return p


# --------------------------------------------------------------------------
if __name__ == "__main__":
    # B == H and num_classes == W so that PyTorch's `logits / temps`
    # trailing-dim broadcast is well-defined (required by the original module).
    B, NUM_CLASSES, IMG_CH, H, W = 8, 8, 3, 8, 8
    FILTERS = [8, 16]

    key = jax.random.PRNGKey(0)
    k_logits, k_image, k_params = jax.random.split(key, 3)
    logits = jax.random.normal(k_logits, (B, NUM_CLASSES, H, W), jnp.float32)
    image = jax.random.normal(k_image, (B, IMG_CH, H, W), jnp.float32)

    params = init_params(k_params, IMG_CH, NUM_CLASSES, FILTERS)
    (wslab, bslab), meta = prepare_params(params, NUM_CLASSES, IMG_CH, H, W)

    fwd = jax.jit(functools.partial(scts_forward, geom=meta["geom"],
                                    woff=meta["woff"], boff=meta["boff"],
                                    eps=EPS))
    out = jax.block_until_ready(fwd(wslab, bslab, logits, image))
    assert out.shape == logits.shape and bool(jnp.all(jnp.isfinite(out)))
    print("KERNEL_OK")
</pallas_src>

<mosaic_0001>
module attributes {stable_mosaic.version = 11 : i64} {
  func.func @_scts_kernel(%arg0: memref<8x704xf32, #tpu.memory_space<vmem>>, %arg1: memref<960x128xbf16, #tpu.memory_space<vmem>>, %arg2: memref<16x128xf32, #tpu.memory_space<vmem>>, %arg3: memref<8x512xf32, #tpu.memory_space<vmem>>) attributes {dimension_semantics = [], scalar_prefetch = 0 : i64, scratch_operands = 0 : i64, tpu.core_type = #tpu.core_type<tc>} {
    %c0 = arith.constant 0 : index
    %c0_0 = arith.constant 0 : index
    %0 = vector.load %arg0[%c0, %c0_0] : memref<8x704xf32, #tpu.memory_space<vmem>>, vector<8x704xf32>
    %1 = arith.truncf %0 : vector<8x704xf32> to vector<8x704xbf16>
    %c0_1 = arith.constant 0 : index
    %c0_2 = arith.constant 0 : index
    %2 = vector.load %arg1[%c0_1, %c0_2] : memref<960x128xbf16, #tpu.memory_space<vmem>>, vector<704x128xbf16>
    %cst = arith.constant dense<0.000000e+00> : vector<8x128xf32>
    %3 = tpu.matmul %1, %2, %cst {dimension_numbers = #tpu.dot_dimension_numbers<[1], [0], [0], [1], [0, 0, 1, 1], [], []>} : vector<8x704xbf16>, vector<704x128xbf16>, vector<8x128xf32> -> vector<8x128xf32>
    %c0_3 = arith.constant 0 : index
    %c0_4 = arith.constant 0 : index
    %4 = vector.load %arg2[%c0_3, %c0_4] : memref<16x128xf32, #tpu.memory_space<vmem>>, vector<1x128xf32>
    %5 = vector.broadcast %4 : vector<1x128xf32> to vector<8x128xf32>
    %6 = arith.addf %3, %5 : vector<8x128xf32>
    %cst_5 = arith.constant 0.00999999977 : f32
    %7 = vector.broadcast %cst_5 : f32 to vector<8x128xf32>
    %8 = arith.mulf %7, %6 : vector<8x128xf32>
    %9 = arith.maximumf %6, %8 : vector<8x128xf32>
    %10 = vector.extract_strided_slice %9 {offsets = [0, 0], sizes = [8, 8], strides = [1, 1]} : vector<8x128xf32> to vector<8x8xf32>
    %11 = vector.extract_strided_slice %9 {offsets = [0, 8], sizes = [8, 8], strides = [1, 1]} : vector<8x128xf32> to vector<8x8xf32>
    %12 = arith.maximumf %10, %11 : vector<8x8xf32>
    %13 = vector.extract_strided_slice %9 {offsets = [0, 32], sizes = [8, 8], strides = [1, 1]} : vector<8x128xf32> to vector<8x8xf32>
    %14 = arith.maximumf %12, %13 : vector<8x8xf32>
    %15 = vector.extract_strided_slice %9 {offsets = [0, 40], sizes = [8, 8], strides = [1, 1]} : vector<8x128xf32> to vector<8x8xf32>
    %16 = arith.maximumf %14, %15 : vector<8x8xf32>
    %17 = vector.extract_strided_slice %9 {offsets = [0, 8], sizes = [8, 8], strides = [1, 1]} : vector<8x128xf32> to vector<8x8xf32>
    %18 = vector.extract_strided_slice %9 {offsets = [0, 16], sizes = [8, 8], strides = [1, 1]} : vector<8x128xf32> to vector<8x8xf32>
    %19 = arith.maximumf %17, %18 : vector<8x8xf32>
    %20 = vector.extract_strided_slice %9 {offsets = [0, 24], sizes = [8, 8], strides = [1, 1]} : vector<8x128xf32> to vector<8x8xf32>
    %21 = arith.maximumf %19, %20 : vector<8x8xf32>
    %22 = vector.extract_strided_slice %9 {offsets = [0, 40], sizes = [8, 8], strides = [1, 1]} : vector<8x128xf32> to vector<8x8xf32>
    %23 = arith.maximumf %21, %22 : vector<8x8xf32>
    %24 = vector.extract_strided_slice %9 {offsets = [0, 48], sizes = [8, 8], strides = [1, 1]} : vector<8x128xf32> to vector<8x8xf32>
    %25 = arith.maximumf %23, %24 : vector<8x8xf32>
    %26 = vector.extract_strided_slice %9 {offsets = [0, 56], sizes = [8, 8], strides = [1, 1]} : vector<8x128xf32> to vector<8x8xf32>
    %27 = arith.maximumf %25, %26 : vector<8x8xf32>
    %28 = vector.extract_strided_slice %9 {offsets = [0, 32], sizes = [8, 8], strides = [1, 1]} : vector<8x128xf32> to vector<8x8xf32>
    %29 = vector.extract_strided_slice %9 {offsets = [0, 40], sizes = [8, 8], strides = [1, 1]} : vector<8x128xf32> to vector<8x8xf32>
    %30 = arith.maximumf %28, %29 : vector<8x8xf32>
    %31 = vector.extract_strided_slice %9 {offsets = [0, 64], sizes = [8, 8], strides = [1, 1]} : vector<8x128xf32> to vector<8x8xf32>
    %32 = arith.maximumf %30, %31 : vector<8x8xf32>
    %33 = vector.extract_strided_slice %9 {offsets = [0, 72], sizes = [8, 8], strides = [1, 1]} : vector<8x128xf32> to vector<8x8xf32>
    %34 = arith.maximumf %32, %33 : vector<8x8xf32>
    %35 = vector.extract_strided_slice %9 {offsets = [0, 96], sizes = [8, 8], strides = [1, 1]} : vector<8x128xf32> to vector<8x8xf32>
    %36 = arith.maximumf %34, %35 : vector<8x8xf32>
    %37 = vector.extract_strided_slice %9 {offsets = [0, 104], sizes = [8, 8], strides = [1, 1]} : vector<8x128xf32> to vector<8x8xf32>
    %38 = arith.maximumf %36, %37 : vector<8x8xf32>
    %39 = vector.extract_strided_slice %9 {offsets = [0, 40], sizes = [8, 8], strides = [1, 1]} : vector<8x128xf32> to vector<8x8xf32>
    %40 = vector.extract_strided_slice %9 {offsets = [0, 48], sizes = [8, 8], strides = [1, 1]} : vector<8x128xf32> to vector<8x8xf32>
    %41 = arith.maximumf %39, %40 : vector<8x8xf32>
    %42 = vector.extract_strided_slice %9 {offsets = [0, 56], sizes = [8, 8], strides = [1, 1]} : vector<8x128xf32> to vector<8x8xf32>
    %43 = arith.maximumf %41, %42 : vector<8x8xf32>
    %44 = vector.extract_strided_slice %9 {offsets = [0, 72], sizes = [8, 8], strides = [1, 1]} : vector<8x128xf32> to vector<8x8xf32>
    %45 = arith.maximumf %43, %44 : vector<8x8xf32>
    %46 = vector.extract_strided_slice %9 {offsets = [0, 80], sizes = [8, 8], strides = [1, 1]} : vector<8x128xf32> to vector<8x8xf32>
    %47 = arith.maximumf %45, %46 : vector<8x8xf32>
    %48 = vector.extract_strided_slice %9 {offsets = [0, 88], sizes = [8, 8], strides = [1, 1]} : vector<8x128xf32> to vector<8x8xf32>
    %49 = arith.maximumf %47, %48 : vector<8x8xf32>
    %50 = vector.extract_strided_slice %9 {offsets = [0, 104], sizes = [8, 8], strides = [1, 1]} : vector<8x128xf32> to vector<8x8xf32>
    %51 = arith.maximumf %49, %50 : vector<8x8xf32>
    %52 = vector.extract_strided_slice %9 {offsets = [0, 112], sizes = [8, 8], strides = [1, 1]} : vector<8x128xf32> to vector<8x8xf32>
    %53 = arith.maximumf %51, %52 : vector<8x8xf32>
    %54 = vector.extract_strided_slice %9 {offsets = [0, 120], sizes = [8, 8], strides = [1, 1]} : vector<8x128xf32> to vector<8x8xf32>
    %55 = arith.maximumf %53, %54 : vector<8x8xf32>
    %56 = tpu.concatenate %16, %27, %38, %55 in 1 : vector<8x8xf32>, vector<8x8xf32>, vector<8x8xf32>, vector<8x8xf32> -> vector<8x32xf32>
    %57 = arith.truncf %56 : vector<8x32xf32> to vector<8x32xbf16>
    %c704 = arith.constant 704 : index
    %c0_6 = arith.constant 0 : index
    %58 = vector.load %arg1[%c704, %c0_6] : memref<960x128xbf16, #tpu.memory_space<vmem>>, vector<32x32xbf16>
    %cst_7 = arith.constant dense<0.000000e+00> : vector<8x32xf32>
    %59 = tpu.matmul %57, %58, %cst_7 {dimension_numbers = #tpu.dot_dimension_numbers<[1], [0], [0], [1], [0, 0, 1, 1], [], []>} : vector<8x32xbf16>, vector<32x32xbf16>, vector<8x32xf32> -> vector<8x32xf32>
    %c1 = arith.constant 1 : index
    %c0_8 = arith.constant 0 : index
    %60 = vector.load %arg2[%c1, %c0_8] : memref<16x128xf32, #tpu.memory_space<vmem>>, vector<1x32xf32>
    %61 = vector.broadcast %60 : vector<1x32xf32> to vector<8x32xf32>
    %62 = arith.addf %59, %61 : vector<8x32xf32>
    %cst_9 = arith.constant 0.00999999977 : f32
    %63 = vector.broadcast %cst_9 : f32 to vector<8x32xf32>
    %64 = arith.mulf %63, %62 : vector<8x32xf32>
    %65 = arith.maximumf %62, %64 : vector<8x32xf32>
    %66 = arith.truncf %65 : vector<8x32xf32> to vector<8x32xbf16>
    %c736 = arith.constant 736 : index
    %c0_10 = arith.constant 0 : index
    %67 = vector.load %arg1[%c736, %c0_10] : memref<960x128xbf16, #tpu.memory_space<vmem>>, vector<32x32xbf16>
    %cst_11 = arith.constant dense<0.000000e+00> : vector<8x32xf32>
    %68 = tpu.matmul %66, %67, %cst_11 {dimension_numbers = #tpu.dot_dimension_numbers<[1], [0], [0], [1], [0, 0, 1, 1], [], []>} : vector<8x32xbf16>, vector<32x32xbf16>, vector<8x32xf32> -> vector<8x32xf32>
    %c2 = arith.constant 2 : index
    %c0_12 = arith.constant 0 : index
    %69 = vector.load %arg2[%c2, %c0_12] : memref<16x128xf32, #tpu.memory_space<vmem>>, vector<1x32xf32>
    %70 = vector.broadcast %69 : vector<1x32xf32> to vector<8x32xf32>
    %71 = arith.addf %68, %70 : vector<8x32xf32>
    %72 = arith.addf %71, %56 : vector<8x32xf32>
    %cst_13 = arith.constant 0.00999999977 : f32
    %73 = vector.broadcast %cst_13 : f32 to vector<8x32xf32>
    %74 = arith.mulf %73, %72 : vector<8x32xf32>
    %75 = arith.maximumf %72, %74 : vector<8x32xf32>
    %76 = arith.truncf %75 : vector<8x32xf32> to vector<8x32xbf16>
    %c768 = arith.constant 768 : index
    %c0_14 = arith.constant 0 : index
    %77 = vector.load %arg1[%c768, %c0_14] : memref<960x128xbf16, #tpu.memory_space<vmem>>, vector<32x32xbf16>
    %cst_15 = arith.constant dense<0.000000e+00> : vector<8x32xf32>
    %78 = tpu.matmul %76, %77, %cst_15 {dimension_numbers = #tpu.dot_dimension_numbers<[1], [0], [0], [1], [0, 0, 1, 1], [], []>} : vector<8x32xbf16>, vector<32x32xbf16>, vector<8x32xf32> -> vector<8x32xf32>
    %c3 = arith.constant 3 : index
    %c0_16 = arith.constant 0 : index
    %79 = vector.load %arg2[%c3, %c0_16] : memref<16x128xf32, #tpu.memory_space<vmem>>, vector<1x32xf32>
    %80 = vector.broadcast %79 : vector<1x32xf32> to vector<8x32xf32>
    %81 = arith.addf %78, %80 : vector<8x32xf32>
    %cst_17 = arith.constant 0.00999999977 : f32
    %82 = vector.broadcast %cst_17 : f32 to vector<8x32xf32>
    %83 = arith.mulf %82, %81 : vector<8x32xf32>
    %84 = arith.maximumf %81, %83 : vector<8x32xf32>
    %85 = arith.truncf %84 : vector<8x32xf32> to vector<8x32xbf16>
    %c800 = arith.constant 800 : index
    %c0_18 = arith.constant 0 : index
    %86 = vector.load %arg1[%c800, %c0_18] : memref<960x128xbf16, #tpu.memory_space<vmem>>, vector<32x32xbf16>
    %cst_19 = arith.constant dense<0.000000e+00> : vector<8x32xf32>
    %87 = tpu.matmul %85, %86, %cst_19 {dimension_numbers = #tpu.dot_dimension_numbers<[1], [0], [0], [1], [0, 0, 1, 1], [], []>} : vector<8x32xbf16>, vector<32x32xbf16>, vector<8x32xf32> -> vector<8x32xf32>
    %c4 = arith.constant 4 : index
    %c0_20 = arith.constant 0 : index
    %88 = vector.load %arg2[%c4, %c0_20] : memref<16x128xf32, #tpu.memory_space<vmem>>, vector<1x32xf32>
    %89 = vector.broadcast %88 : vector<1x32xf32> to vector<8x32xf32>
    %90 = arith.addf %87, %89 : vector<8x32xf32>
    %91 = arith.addf %90, %75 : vector<8x32xf32>
    %cst_21 = arith.constant 0.00999999977 : f32
    %92 = vector.broadcast %cst_21 : f32 to vector<8x32xf32>
    %93 = arith.mulf %92, %91 : vector<8x32xf32>
    %94 = arith.maximumf %91, %93 : vector<8x32xf32>
    %95 = arith.truncf %94 : vector<8x32xf32> to vector<8x32xbf16>
    %c832 = arith.constant 832 : index
    %c0_22 = arith.constant 0 : index
    %96 = vector.load %arg1[%c832, %c0_22] : memref<960x128xbf16, #tpu.memory_space<vmem>>, vector<32x16xbf16>
    %cst_23 = arith.constant dense<0.000000e+00> : vector<8x16xf32>
    %97 = tpu.matmul %95, %96, %cst_23 {dimension_numbers = #tpu.dot_dimension_numbers<[1], [0], [0], [1], [0, 0, 1, 1], [], []>} : vector<8x32xbf16>, vector<32x16xbf16>, vector<8x16xf32> -> vector<8x16xf32>
    %c5 = arith.constant 5 : index
    %c0_24 = arith.constant 0 : index
    %98 = vector.load %arg2[%c5, %c0_24] : memref<16x128xf32, #tpu.memory_space<vmem>>, vector<1x16xf32>
    %99 = vector.broadcast %98 : vector<1x16xf32> to vector<8x16xf32>
    %100 = arith.addf %97, %99 : vector<8x16xf32>
    %cst_25 = arith.constant 0.00999999977 : f32
    %101 = vector.broadcast %cst_25 : f32 to vector<8x16xf32>
    %102 = arith.mulf %101, %100 : vector<8x16xf32>
    %103 = arith.maximumf %100, %102 : vector<8x16xf32>
    %104 = arith.truncf %103 : vector<8x16xf32> to vector<8x16xbf16>
    %c864 = arith.constant 864 : index
    %c0_26 = arith.constant 0 : index
    %105 = vector.load %arg1[%c864, %c0_26] : memref<960x128xbf16, #tpu.memory_space<vmem>>, vector<16x16xbf16>
    %cst_27 = arith.constant dense<0.000000e+00> : vector<8x16xf32>
    %106 = tpu.matmul %104, %105, %cst_27 {dimension_numbers = #tpu.dot_dimension_numbers<[1], [0], [0], [1], [0, 0, 1, 1], [], []>} : vector<8x16xbf16>, vector<16x16xbf16>, vector<8x16xf32> -> vector<8x16xf32>
    %c6 = arith.constant 6 : index
    %c0_28 = arith.constant 0 : index
    %107 = vector.load %arg2[%c6, %c0_28] : memref<16x128xf32, #tpu.memory_space<vmem>>, vector<1x16xf32>
    %108 = vector.broadcast %107 : vector<1x16xf32> to vector<8x16xf32>
    %109 = arith.addf %106, %108 : vector<8x16xf32>
    %110 = arith.truncf %94 : vector<8x32xf32> to vector<8x32xbf16>
    %c880 = arith.constant 880 : index
    %c0_29 = arith.constant 0 : index
    %111 = vector.load %arg1[%c880, %c0_29] : memref<960x128xbf16, #tpu.memory_space<vmem>>, vector<32x16xbf16>
    %cst_30 = arith.constant dense<0.000000e+00> : vector<8x16xf32>
    %112 = tpu.matmul %110, %111, %cst_30 {dimension_numbers = #tpu.dot_dimension_numbers<[1], [0], [0], [1], [0, 0, 1, 1], [], []>} : vector<8x32xbf16>, vector<32x16xbf16>, vector<8x16xf32> -> vector<8x16xf32>
    %c7 = arith.constant 7 : index
    %c0_31 = arith.constant 0 : index
    %113 = vector.load %arg2[%c7, %c0_31] : memref<16x128xf32, #tpu.memory_space<vmem>>, vector<1x16xf32>
    %114 = vector.broadcast %113 : vector<1x16xf32> to vector<8x16xf32>
    %115 = arith.addf %112, %114 : vector<8x16xf32>
    %116 = arith.addf %109, %115 : vector<8x16xf32>
    %cst_32 = arith.constant 0.00999999977 : f32
    %117 = vector.broadcast %cst_32 : f32 to vector<8x16xf32>
    %118 = arith.mulf %117, %116 : vector<8x16xf32>
    %119 = arith.maximumf %116, %118 : vector<8x16xf32>
    %120 = arith.truncf %119 : vector<8x16xf32> to vector<8x16xbf16>
    %c912 = arith.constant 912 : index
    %c0_33 = arith.constant 0 : index
    %121 = vector.load %arg1[%c912, %c0_33] : memref<960x128xbf16, #tpu.memory_space<vmem>>, vector<16x16xbf16>
    %cst_34 = arith.constant dense<0.000000e+00> : vector<8x16xf32>
    %122 = tpu.matmul %120, %121, %cst_34 {dimension_numbers = #tpu.dot_dimension_numbers<[1], [0], [0], [1], [0, 0, 1, 1], [], []>} : vector<8x16xbf16>, vector<16x16xbf16>, vector<8x16xf32> -> vector<8x16xf32>
    %c8 = arith.constant 8 : index
    %c0_35 = arith.constant 0 : index
    %123 = vector.load %arg2[%c8, %c0_35] : memref<16x128xf32, #tpu.memory_space<vmem>>, vector<1x16xf32>
    %124 = vector.broadcast %123 : vector<1x16xf32> to vector<8x16xf32>
    %125 = arith.addf %122, %124 : vector<8x16xf32>
    %cst_36 = arith.constant 0.00999999977 : f32
    %126 = vector.broadcast %cst_36 : f32 to vector<8x16xf32>
    %127 = arith.mulf %126, %125 : vector<8x16xf32>
    %128 = arith.maximumf %125, %127 : vector<8x16xf32>
    %129 = arith.truncf %128 : vector<8x16xf32> to vector<8x16xbf16>
    %c928 = arith.constant 928 : index
    %c0_37 = arith.constant 0 : index
    %130 = vector.load %arg1[%c928, %c0_37] : memref<960x128xbf16, #tpu.memory_space<vmem>>, vector<16x16xbf16>
    %cst_38 = arith.constant dense<0.000000e+00> : vector<8x16xf32>
    %131 = tpu.matmul %129, %130, %cst_38 {dimension_numbers = #tpu.dot_dimension_numbers<[1], [0], [0], [1], [0, 0, 1, 1], [], []>} : vector<8x16xbf16>, vector<16x16xbf16>, vector<8x16xf32> -> vector<8x16xf32>
    %c9 = arith.constant 9 : index
    %c0_39 = arith.constant 0 : index
    %132 = vector.load %arg2[%c9, %c0_39] : memref<16x128xf32, #tpu.memory_space<vmem>>, vector<1x16xf32>
    %133 = vector.broadcast %132 : vector<1x16xf32> to vector<8x16xf32>
    %134 = arith.addf %131, %133 : vector<8x16xf32>
    %135 = arith.addf %134, %119 : vector<8x16xf32>
    %cst_40 = arith.constant 0.00999999977 : f32
    %136 = vector.broadcast %cst_40 : f32 to vector<8x16xf32>
    %137 = arith.mulf %136, %135 : vector<8x16xf32>
    %138 = arith.maximumf %135, %137 : vector<8x16xf32>
    %139 = arith.truncf %138 : vector<8x16xf32> to vector<8x16xbf16>
    %c944 = arith.constant 944 : index
    %c0_41 = arith.constant 0 : index
    %140 = vector.load %arg1[%c944, %c0_41] : memref<960x128xbf16, #tpu.memory_space<vmem>>, vector<16x8xbf16>
    %cst_42 = arith.constant dense<0.000000e+00> : vector<8x8xf32>
    %141 = tpu.matmul %139, %140, %cst_42 {dimension_numbers = #tpu.dot_dimension_numbers<[1], [0], [0], [1], [0, 0, 1, 1], [], []>} : vector<8x16xbf16>, vector<16x8xbf16>, vector<8x8xf32> -> vector<8x8xf32>
    %c10 = arith.constant 10 : index
    %c0_43 = arith.constant 0 : index
    %142 = vector.load %arg2[%c10, %c0_43] : memref<16x128xf32, #tpu.memory_space<vmem>>, vector<1x8xf32>
    %143 = vector.broadcast %142 : vector<1x8xf32> to vector<8x8xf32>
    %144 = arith.addf %141, %143 : vector<8x8xf32>
    %145 = math.absf %144 : vector<8x8xf32>
    %cst_44 = arith.constant 9.99999997E-7 : f32
    %146 = vector.broadcast %cst_44 : f32 to vector<8x8xf32>
    %147 = arith.addf %145, %146 : vector<8x8xf32>
    %148 = tpu.reciprocal %147 : vector<8x8xf32> -> vector<8x8xf32>
    %149 = vector.extract_strided_slice %148 {offsets = [0, 0], sizes = [1, 8], strides = [1, 1]} : vector<8x8xf32> to vector<1x8xf32>
    %150 = vector.extract_strided_slice %148 {offsets = [1, 0], sizes = [1, 8], strides = [1, 1]} : vector<8x8xf32> to vector<1x8xf32>
    %151 = vector.extract_strided_slice %148 {offsets = [2, 0], sizes = [1, 8], strides = [1, 1]} : vector<8x8xf32> to vector<1x8xf32>
    %152 = vector.extract_strided_slice %148 {offsets = [3, 0], sizes = [1, 8], strides = [1, 1]} : vector<8x8xf32> to vector<1x8xf32>
    %153 = vector.extract_strided_slice %148 {offsets = [4, 0], sizes = [1, 8], strides = [1, 1]} : vector<8x8xf32> to vector<1x8xf32>
    %154 = vector.extract_strided_slice %148 {offsets = [5, 0], sizes = [1, 8], strides = [1, 1]} : vector<8x8xf32> to vector<1x8xf32>
    %155 = vector.extract_strided_slice %148 {offsets = [6, 0], sizes = [1, 8], strides = [1, 1]} : vector<8x8xf32> to vector<1x8xf32>
    %156 = vector.extract_strided_slice %148 {offsets = [7, 0], sizes = [1, 8], strides = [1, 1]} : vector<8x8xf32> to vector<1x8xf32>
    %157 = tpu.concatenate %149, %150, %151, %152, %153, %154, %155, %156 in 1 : vector<1x8xf32>, vector<1x8xf32>, vector<1x8xf32>, vector<1x8xf32>, vector<1x8xf32>, vector<1x8xf32>, vector<1x8xf32>, vector<1x8xf32> -> vector<1x64xf32>
    %158 = tpu.concatenate %157, %157, %157, %157, %157, %157, %157, %157 in 1 : vector<1x64xf32>, vector<1x64xf32>, vector<1x64xf32>, vector<1x64xf32>, vector<1x64xf32>, vector<1x64xf32>, vector<1x64xf32>, vector<1x64xf32> -> vector<1x512xf32>
    %159 = vector.extract_strided_slice %0 {offsets = [0, 0], sizes = [8, 512], strides = [1, 1]} : vector<8x704xf32> to vector<8x512xf32>
    %160 = vector.broadcast %158 : vector<1x512xf32> to vector<8x512xf32>
    %161 = arith.mulf %159, %160 : vector<8x512xf32>
    %c0_45 = arith.constant 0 : index
    %c0_46 = arith.constant 0 : index
    %162 = vector.load %arg3[%c0_45, %c0_46] : memref<8x512xf32, #tpu.memory_space<vmem>>, vector<8x512xf32>
    tpu.vector_store %arg3[%c0_45, %c0_46], %161 {strides = array<i32>} : memref<8x512xf32, #tpu.memory_space<vmem>>, vector<8x512xf32>,
    return
  }
}

</mosaic_0001>

<llo_original>
// kernel: scts_forward.1
$region0: #{scts_forward.1}
  #allocation0 [shape = 'u32[]', space=smem, size = 0x4, offset = 0x4, fixed_abs, tag = 'smem constant byte address 0x4 - core index']
  #allocation1 [shape = 'u32[144,128]{1,0:T(1,128)}', space=vmem, size = 0x12000, scoped, tag = 'internal scratch']
  %s0 = inlined_call_operand.vmem [shape: f32[8,704], index: 0, kind: input, shape index: {}]
  %s1 = inlined_call_operand.vmem [shape: bf16[960,128], index: 1, kind: input, shape index: {}]
  %s2 = inlined_call_operand.vmem [shape: f32[16,128], index: 2, kind: input, shape index: {}]
  %s3 = inlined_call_operand.vmem [shape: f32[8,512], index: 3, kind: output, shape index: {}]
  %s4 = sld [smem:[#allocation0]]
  $region22: #{scts_forward.1} parent=0
    _
  %s6 = ssub.s32 1, %s4
  %s7 = scalar_select 0, %s6, %s4
  // Predicated region
  $region2: #{scts_forward.1} parent=0 // pred_check
    _
  $region3: #{scts_forward.1} parent=0 // pred_check_branch
    %9 = sbr.rel (0) target = $region5
  $region4: #{scts_forward.1} parent=0 // pred_region
    _
  $region5: #{scts_forward.1} parent=0 // pred_fallthru
    _
  // Predicated region
  $region6: #{scts_forward.1} parent=0 // pred_check
    _
  $region7: #{scts_forward.1} parent=0 // pred_check_branch
    %11 = sbr.rel (0) target = $region9
  $region8: #{scts_forward.1} parent=0 // pred_region
    _
  $region9: #{scts_forward.1} parent=0 // pred_fallthru
    _
  // Predicated region
  $region10: #{scts_forward.1} parent=0 // pred_check
    _
  $region11: #{scts_forward.1} parent=0 // pred_check_branch
    %13 = sbr.rel (0) target = $region13
  $region12: #{scts_forward.1} parent=0 // pred_region
    _
  $region13: #{scts_forward.1} parent=0 // pred_fallthru
    _
  %v15 = vld [vmem:[%s0] sm:$0xff]
  %v16 = vld [vmem:[%s0 + $0x8] sm:$0xff]
  %v17 = vld [vmem:[%s0 + $0x10] sm:$0xff]
  %v18 = vld [vmem:[%s0 + $0x18] sm:$0xff]
  %v19 = vld [vmem:[%s0 + $0x20] sm:$0xff]
  %v20 = vld [vmem:[%s0 + $0x28] sm:$0xff]
  %v21 = vpack.c.bf16 %v15, %v15
  %v22 = vpack.c.bf16 %v16, %v16
  %v23 = vpack.c.bf16 %v17, %v17
  %v24 = vpack.c.bf16 %v18, %v18
  %v25 = vpack.c.bf16 %v19, %v19
  %v26 = vpack.c.bf16 %v20, %v20
  %v27 = vld [vmem:[%s1] sm:$0xf]
  %v28 = vld [vmem:[%s1 + $0x4] sm:$0xf]
  %v29 = vld [vmem:[%s1 + $0x8] sm:$0xf]
  %v30 = vld [vmem:[%s1 + $0xc] sm:$0xf]
  %v31 = vld [vmem:[%s1 + $0x10] sm:$0xf]
  %v32 = vld [vmem:[%s1 + $0x14] sm:$0xf]
  %v33 = vld [vmem:[%s1 + $0x18] sm:$0xf]
  %v34 = vld [vmem:[%s1 + $0x1c] sm:$0xf]
  %v35 = vld [vmem:[%s1 + $0x20] sm:$0xf]
  %v36 = vld [vmem:[%s1 + $0x24] sm:$0xf]
  %v37 = vld [vmem:[%s1 + $0x28] sm:$0xf]
  %v38 = vld [vmem:[%s1 + $0x2c] sm:$0xf]
  %v39 = vld [vmem:[%s1 + $0x30] sm:$0xf]
  %v40 = vld [vmem:[%s1 + $0x34] sm:$0xf]
  %v41 = vld [vmem:[%s1 + $0x38] sm:$0xf]
  %v42 = vld [vmem:[%s1 + $0x3c] sm:$0xf]
  %v43 = vld [vmem:[%s1 + $0x40] sm:$0xf]
  %v44 = vld [vmem:[%s1 + $0x44] sm:$0xf]
  %v45 = vld [vmem:[%s1 + $0x48] sm:$0xf]
  %v46 = vld [vmem:[%s1 + $0x4c] sm:$0xf]
  %v47 = vld [vmem:[%s1 + $0x50] sm:$0xf]
  %v48 = vld [vmem:[%s1 + $0x54] sm:$0xf]
  %v49 = vld [vmem:[%s1 + $0x58] sm:$0xf]
  %v50 = vld [vmem:[%s1 + $0x5c] sm:$0xf]
  %v51 = vld [vmem:[%s1 + $0x60] sm:$0xf]
  %v52 = vld [vmem:[%s1 + $0x64] sm:$0xf]
  %v53 = vld [vmem:[%s1 + $0x68] sm:$0xf]
  %v54 = vld [vmem:[%s1 + $0x6c] sm:$0xf]
  %v55 = vld [vmem:[%s1 + $0x70] sm:$0xf]
  %v56 = vld [vmem:[%s1 + $0x74] sm:$0xf]
  %v57 = vld [vmem:[%s1 + $0x78] sm:$0xf]
  %v58 = vld [vmem:[%s1 + $0x7c] sm:$0xf]
  %v59 = vld [vmem:[%s1 + $0x80] sm:$0xf]
  %v60 = vld [vmem:[%s1 + $0x84] sm:$0xf]
  %v61 = vld [vmem:[%s1 + $0x88] sm:$0xf]
  %v62 = vld [vmem:[%s1 + $0x8c] sm:$0xf]
  %v63 = vld [vmem:[%s1 + $0x90] sm:$0xf]
  %v64 = vld [vmem:[%s1 + $0x94] sm:$0xf]
  %v65 = vld [vmem:[%s1 + $0x98] sm:$0xf]
  %v66 = vld [vmem:[%s1 + $0x9c] sm:$0xf]
  %v67 = vld [vmem:[%s1 + $0xa0] sm:$0xf]
  %v68 = vld [vmem:[%s1 + $0xa4] sm:$0xf]
  %v69 = vld [vmem:[%s1 + $0xa8] sm:$0xf]
  %v70 = vld [vmem:[%s1 + $0xac] sm:$0xf]
  %v71 = vld [vmem:[%s1 + $0xb0] sm:$0xf]
  %v72 = vld [vmem:[%s1 + $0xb4] sm:$0xf]
  %v73 = vld [vmem:[%s1 + $0xb8] sm:$0xf]
  %v74 = vld [vmem:[%s1 + $0xbc] sm:$0xf]
  %v75 = vld [vmem:[%s1 + $0xc0] sm:$0xf]
  %v76 = vld [vmem:[%s1 + $0xc4] sm:$0xf]
  %v77 = vld [vmem:[%s1 + $0xc8] sm:$0xf]
  %v78 = vld [vmem:[%s1 + $0xcc] sm:$0xf]
  %v79 = vld [vmem:[%s1 + $0xd0] sm:$0xf]
  %v80 = vld [vmem:[%s1 + $0xd4] sm:$0xf]
  %v81 = vld [vmem:[%s1 + $0xd8] sm:$0xf]
  %v82 = vld [vmem:[%s1 + $0xdc] sm:$0xf]
  %v83 = vld [vmem:[%s1 + $0xe0] sm:$0xf]
  %v84 = vld [vmem:[%s1 + $0xe4] sm:$0xf]
  %v85 = vld [vmem:[%s1 + $0xe8] sm:$0xf]
  %v86 = vld [vmem:[%s1 + $0xec] sm:$0xf]
  %v87 = vld [vmem:[%s1 + $0xf0] sm:$0xf]
  %v88 = vld [vmem:[%s1 + $0xf4] sm:$0xf]
  %v89 = vld [vmem:[%s1 + $0xf8] sm:$0xf]
  %v90 = vld [vmem:[%s1 + $0xfc] sm:$0xf]
  %v91 = vld [vmem:[%s1 + $0x100] sm:$0xf]
  %v92 = vld [vmem:[%s1 + $0x104] sm:$0xf]
  %v93 = vld [vmem:[%s1 + $0x108] sm:$0xf]
  %v94 = vld [vmem:[%s1 + $0x10c] sm:$0xf]
  %v95 = vld [vmem:[%s1 + $0x110] sm:$0xf]
  %v96 = vld [vmem:[%s1 + $0x114] sm:$0xf]
  %v97 = vld [vmem:[%s1 + $0x118] sm:$0xf]
  %v98 = vld [vmem:[%s1 + $0x11c] sm:$0xf]
  %v99 = vld [vmem:[%s1 + $0x120] sm:$0xf]
  %v100 = vld [vmem:[%s1 + $0x124] sm:$0xf]
  %v101 = vld [vmem:[%s1 + $0x128] sm:$0xf]
  %v102 = vld [vmem:[%s1 + $0x12c] sm:$0xf]
  %v103 = vld [vmem:[%s1 + $0x130] sm:$0xf]
  %v104 = vld [vmem:[%s1 + $0x134] sm:$0xf]
  %v105 = vld [vmem:[%s1 + $0x138] sm:$0xf]
  %v106 = vld [vmem:[%s1 + $0x13c] sm:$0xf]
  %v107 = vld [vmem:[%s1 + $0x140] sm:$0xf]
  %v108 = vld [vmem:[%s1 + $0x144] sm:$0xf]
  %v109 = vld [vmem:[%s1 + $0x148] sm:$0xf]
  %v110 = vld [vmem:[%s1 + $0x14c] sm:$0xf]
  %v111 = vld [vmem:[%s1 + $0x150] sm:$0xf]
  %v112 = vld [vmem:[%s1 + $0x154] sm:$0xf]
  %v113 = vld [vmem:[%s1 + $0x158] sm:$0xf]
  %v114 = vld [vmem:[%s1 + $0x15c] sm:$0xf]
  %v115 = vld [vmem:[%s2] sm:$0x1]
  %v116 = vlaneseq
  %v117 = vshrl.u32 %v116, 7
  %v118 = vsub.s32 0, %v117
  %v119 = vrot.slane %v115, %v118
  %v208 = vunpack.c.l.b16 %v27
  %v209 = vunpack.c.l.b16 %v28
  %v210 = vunpack.c.l.b16 %v29
  %v211 = vunpack.c.l.b16 %v30
  %v212 = vunpack.c.l.b16 %v31
  %v213 = vunpack.c.l.b16 %v32
  %v214 = vunpack.c.l.b16 %v33
  %v215 = vunpack.c.l.b16 %v34
  %v216 = vunpack.c.l.b16 %v35
  %v217 = vunpack.c.l.b16 %v36
  %v218 = vunpack.c.l.b16 %v37
  %v219 = vunpack.c.l.b16 %v38
  %v220 = vunpack.c.l.b16 %v39
  %v221 = vunpack.c.l.b16 %v40
  %v222 = vunpack.c.l.b16 %v41
  %v223 = vunpack.c.l.b16 %v42
  %v224 = vunpack.c.l.b16 %v43
  %v225 = vunpack.c.l.b16 %v44
  %v226 = vunpack.c.l.b16 %v45
  %v227 = vunpack.c.l.b16 %v46
  %v228 = vunpack.c.l.b16 %v47
  %v229 = vunpack.c.l.b16 %v48
  %v230 = vunpack.c.l.b16 %v49
  %v231 = vunpack.c.l.b16 %v50
  %v232 = vunpack.c.l.b16 %v51
  %v233 = vunpack.c.l.b16 %v52
  %v234 = vunpack.c.l.b16 %v53
  %v235 = vunpack.c.l.b16 %v54
  %v236 = vunpack.c.l.b16 %v55
  %v237 = vunpack.c.l.b16 %v56
  %v238 = vunpack.c.l.b16 %v57
  %v239 = vunpack.c.l.b16 %v58
  %v240 = vunpack.c.l.b16 %v59
  %v241 = vunpack.c.l.b16 %v60
  %v242 = vunpack.c.l.b16 %v61
  %v243 = vunpack.c.l.b16 %v62
  %v244 = vunpack.c.l.b16 %v63
  %v245 = vunpack.c.l.b16 %v64
  %v246 = vunpack.c.l.b16 %v65
  %v247 = vunpack.c.l.b16 %v66
  %v248 = vunpack.c.l.b16 %v67
  %v249 = vunpack.c.l.b16 %v68
  %v250 = vunpack.c.l.b16 %v69
  %v251 = vunpack.c.l.b16 %v70
  %v252 = vunpack.c.l.b16 %v71
  %v253 = vunpack.c.l.b16 %v72
  %v254 = vunpack.c.l.b16 %v73
  %v255 = vunpack.c.l.b16 %v74
  %v256 = vunpack.c.l.b16 %v75
  %v257 = vunpack.c.l.b16 %v76
  %v258 = vunpack.c.l.b16 %v77
  %v259 = vunpack.c.l.b16 %v78
  %v260 = vunpack.c.l.b16 %v79
  %v261 = vunpack.c.l.b16 %v80
  %v262 = vunpack.c.l.b16 %v81
  %v263 = vunpack.c.l.b16 %v82
  %v264 = vunpack.c.l.b16 %v83
  %v265 = vunpack.c.l.b16 %v84
  %v266 = vunpack.c.l.b16 %v85
  %v267 = vunpack.c.l.b16 %v86
  %v268 = vunpack.c.l.b16 %v87
  %v269 = vunpack.c.l.b16 %v88
  %v270 = vunpack.c.l.b16 %v89
  %v271 = vunpack.c.l.b16 %v90
  %v272 = vunpack.c.l.b16 %v91
  %v273 = vunpack.c.l.b16 %v92
  %v274 = vunpack.c.l.b16 %v93
  %v275 = vunpack.c.l.b16 %v94
  %v276 = vunpack.c.l.b16 %v95
  %v277 = vunpack.c.l.b16 %v96
  %v278 = vunpack.c.l.b16 %v97
  %v279 = vunpack.c.l.b16 %v98
  %v280 = vunpack.c.l.b16 %v99
  %v281 = vunpack.c.l.b16 %v100
  %v282 = vunpack.c.l.b16 %v101
  %v283 = vunpack.c.l.b16 %v102
  %v284 = vunpack.c.l.b16 %v103
  %v285 = vunpack.c.l.b16 %v104
  %v286 = vunpack.c.l.b16 %v105
  %v287 = vunpack.c.l.b16 %v106
  %v288 = vunpack.c.l.b16 %v107
  %v289 = vunpack.c.l.b16 %v108
  %v290 = vunpack.c.l.b16 %v109
  %v291 = vunpack.c.l.b16 %v110
  %v292 = vunpack.c.l.b16 %v111
  %v293 = vunpack.c.l.b16 %v112
  %v294 = vunpack.c.l.b16 %v113
  %v295 = vunpack.c.l.b16 %v114
  %v296 = vpack.c.b16 %v209, %v208
  %v297 = vpack.c.b16 %v211, %v210
  %v298 = vpack.c.b16 %v213, %v212
  %v299 = vpack.c.b16 %v215, %v214
  %v300 = vpack.c.b16 %v217, %v216
  %v301 = vpack.c.b16 %v219, %v218
  %v302 = vpack.c.b16 %v221, %v220
  %v303 = vpack.c.b16 %v223, %v222
  %v304 = vpack.c.b16 %v225, %v224
  %v305 = vpack.c.b16 %v227, %v226
  %v306 = vpack.c.b16 %v229, %v228
  %v307 = vpack.c.b16 %v231, %v230
  %v308 = vpack.c.b16 %v233, %v232
  %v309 = vpack.c.b16 %v235, %v234
  %v310 = vpack.c.b16 %v237, %v236
  %v311 = vpack.c.b16 %v239, %v238
  %v312 = vpack.c.b16 %v241, %v240
  %v313 = vpack.c.b16 %v243, %v242
  %v314 = vpack.c.b16 %v245, %v244
  %v315 = vpack.c.b16 %v247, %v246
  %v316 = vpack.c.b16 %v249, %v248
  %v317 = vpack.c.b16 %v251, %v250
  %v318 = vpack.c.b16 %v253, %v252
  %v319 = vpack.c.b16 %v255, %v254
  %v320 = vpack.c.b16 %v257, %v256
  %v321 = vpack.c.b16 %v259, %v258
  %v322 = vpack.c.b16 %v261, %v260
  %v323 = vpack.c.b16 %v263, %v262
  %v324 = vpack.c.b16 %v265, %v264
  %v325 = vpack.c.b16 %v267, %v266
  %v326 = vpack.c.b16 %v269, %v268
  %v327 = vpack.c.b16 %v271, %v270
  %v328 = vpack.c.b16 %v273, %v272
  %v329 = vpack.c.b16 %v275, %v274
  %v330 = vpack.c.b16 %v277, %v276
  %v331 = vpack.c.b16 %v279, %v278
  %v332 = vpack.c.b16 %v281, %v280
  %v333 = vpack.c.b16 %v283, %v282
  %v334 = vpack.c.b16 %v285, %v284
  %v335 = vpack.c.b16 %v287, %v286
  %v336 = vpack.c.b16 %v289, %v288
  %v337 = vpack.c.b16 %v291, %v290
  %v338 = vpack.c.b16 %v293, %v292
  %v339 = vpack.c.b16 %v295, %v294
  %vm384 = vcmask 523264
  %v386 = vsel %vm384, %v26, 0
  %388 = vmatprep.subr.bf16.mxu0 0
  %389 = vmatpush1.bf16.msra.mxu0 %v303
  %390 = vmatprep.subr.bf16.mxu0 0
  %391 = vmatpush1.bf16.msra.mxu0 %v302
  %392 = vmatprep.subr.bf16.mxu0 0
  %393 = vmatpush1.bf16.msra.mxu0 %v301
  %394 = vmatprep.subr.bf16.mxu0 0
  %395 = vmatpush1.bf16.msra.mxu0 %v300
  %396 = vmatprep.subr.bf16.mxu0 0
  %397 = vmatpush1.bf16.msra.mxu0 %v299
  %398 = vmatprep.subr.bf16.mxu0 0
  %399 = vmatpush1.bf16.msra.mxu0 %v298
  %400 = vmatprep.subr.bf16.mxu0 0
  %401 = vmatpush1.bf16.msra.mxu0 %v297
  %402 = vmatprep.subr.bf16.mxu0 0
  %403 = vmatpush1.bf16.msra.mxu0 %v296
  %404 = vmatprep.subr.bf16.mxu0 0
  %405 = vmatpush2.bf16.msra.mxu0 %v311
  %406 = vmatprep.subr.bf16.mxu0 0
  %407 = vmatpush2.bf16.msra.mxu0 %v310
  %408 = vmatprep.subr.bf16.mxu0 0
  %409 = vmatpush2.bf16.msra.mxu0 %v309
  %410 = vmatprep.subr.bf16.mxu0 0
  %411 = vmatpush2.bf16.msra.mxu0 %v308
  %412 = vmatprep.subr.bf16.mxu0 0
  %413 = vmatpush2.bf16.msra.mxu0 %v307
  %414 = vmatprep.subr.bf16.mxu0 0
  %415 = vmatpush2.bf16.msra.mxu0 %v306
  %416 = vmatprep.subr.bf16.mxu0 0
  %417 = vmatpush2.bf16.msra.mxu0 %v305
  %418 = vmatprep.subr.bf16.mxu0 0
  %419 = vmatpush2.bf16.msra.mxu0 %v304
  %420 = vmatprep.mubr.bf16.mxu0 %v22
  %421 = vmatmul.mubr.bf16.gmra.mxu0 %v21
  %v422 = vpop.f32.mrf.mxu0
  %v423 = vadd.f32 %v119, %v422
  %v424 = vpop.f32.mrf.mxu0
  %v425 = vpop.f32.mrf.mxu0
  %v426 = vpop.f32.mrf.mxu0
  %427 = vdwg.mxu0
  %428 = vmatprep.subr.bf16.mxu0 0
  %429 = vmatpush1.bf16.msra.mxu0 %v319
  %430 = vmatprep.subr.bf16.mxu0 0
  %431 = vmatpush1.bf16.msra.mxu0 %v318
  %432 = vmatprep.subr.bf16.mxu0 0
  %433 = vmatpush1.bf16.msra.mxu0 %v317
  %434 = vmatprep.subr.bf16.mxu0 0
  %435 = vmatpush1.bf16.msra.mxu0 %v316
  %436 = vmatprep.subr.bf16.mxu0 0
  %437 = vmatpush1.bf16.msra.mxu0 %v315
  %438 = vmatprep.subr.bf16.mxu0 0
  %439 = vmatpush1.bf16.msra.mxu0 %v314
  %440 = vmatprep.subr.bf16.mxu0 0
  %441 = vmatpush1.bf16.msra.mxu0 %v313
  %442 = vmatprep.subr.bf16.mxu0 0
  %443 = vmatpush1.bf16.msra.mxu0 %v312
  %444 = vmatprep.subr.bf16.mxu0 0
  %445 = vmatpush2.bf16.msra.mxu0 %v327
  %446 = vmatprep.subr.bf16.mxu0 0
  %447 = vmatpush2.bf16.msra.mxu0 %v326
  %448 = vmatprep.subr.bf16.mxu0 0
  %449 = vmatpush2.bf16.msra.mxu0 %v325
  %450 = vmatprep.subr.bf16.mxu0 0
  %451 = vmatpush2.bf16.msra.mxu0 %v324
  %452 = vmatprep.subr.bf16.mxu0 0
  %453 = vmatpush2.bf16.msra.mxu0 %v323
  %454 = vmatprep.subr.bf16.mxu0 0
  %455 = vmatpush2.bf16.msra.mxu0 %v322
  %456 = vmatprep.subr.bf16.mxu0 0
  %457 = vmatpush2.bf16.msra.mxu0 %v321
  %458 = vmatprep.subr.bf16.mxu0 0
  %459 = vmatpush2.bf16.msra.mxu0 %v320
  %460 = vmatprep.mubr.bf16.mxu0 %v24
  %461 = vmatmul.mubr.bf16.gmra.mxu0 %v23
  %v462 = vpop.f32.mrf.mxu0
  %v463 = vadd.f32 %v423, %v462
  %v464 = vpop.f32.mrf.mxu0
  %v465 = vpop.f32.mrf.mxu0
  %v466 = vpop.f32.mrf.mxu0
  %467 = vdwg.mxu0
  %468 = vmatprep.subr.bf16.mxu0 0
  %469 = vmatpush1.bf16.msra.mxu0 %v335
  %470 = vmatprep.subr.bf16.mxu0 0
  %471 = vmatpush1.bf16.msra.mxu0 %v334
  %472 = vmatprep.subr.bf16.mxu0 0
  %473 = vmatpush1.bf16.msra.mxu0 %v333
  %474 = vmatprep.subr.bf16.mxu0 0
  %475 = vmatpush1.bf16.msra.mxu0 %v332
  %476 = vmatprep.subr.bf16.mxu0 0
  %477 = vmatpush1.bf16.msra.mxu0 %v331
  %478 = vmatprep.subr.bf16.mxu0 0
  %479 = vmatpush1.bf16.msra.mxu0 %v330
  %480 = vmatprep.subr.bf16.mxu0 0
  %481 = vmatpush1.bf16.msra.mxu0 %v329
  %482 = vmatprep.subr.bf16.mxu0 0
  %483 = vmatpush1.bf16.msra.mxu0 %v328
  %484 = vmatprep.subr.bf16.mxu0 0
  %485 = vmatpush2.bf16.msra.mxu0 0
  %486 = vmatprep.subr.bf16.mxu0 0
  %487 = vmatpush2.bf16.msra.mxu0 0
  %488 = vmatprep.subr.bf16.mxu0 0
  %489 = vmatpush2.bf16.msra.mxu0 0
  %490 = vmatprep.subr.bf16.mxu0 0
  %491 = vmatpush2.bf16.msra.mxu0 0
  %492 = vmatprep.subr.bf16.mxu0 0
  %493 = vmatpush2.bf16.msra.mxu0 %v339
  %494 = vmatprep.subr.bf16.mxu0 0
  %495 = vmatpush2.bf16.msra.mxu0 %v338
  %496 = vmatprep.subr.bf16.mxu0 0
  %497 = vmatpush2.bf16.msra.mxu0 %v337
  %498 = vmatprep.subr.bf16.mxu0 0
  %499 = vmatpush2.bf16.msra.mxu0 %v336
  %500 = vmatprep.mubr.bf16.mxu0 %v386
  %501 = vmatmul.mubr.bf16.gmra.mxu0 %v25
  %v502 = vpop.f32.mrf.mxu0
  %v503 = vadd.f32 %v463, %v502
  %v504 = vpop.f32.mrf.mxu0
  %v505 = vpop.f32.mrf.mxu0
  %v506 = vpop.f32.mrf.mxu0
  %507 = vdwg.mxu0
  %v508 = vmul.f32 %v503, 0.01
  %v509 = vmax.f32 %v503, %v508
  %511 = vrot.lane.b32.xlu0 %v509, 120
  %v512 = vpop.permute.xlu0 %511
  %v514 = vmax.f32 %v509, %v512
  %515 = vrot.lane.b32.xlu0 %v509, 96
  %v516 = vpop.permute.xlu0 %515
  %v518 = vmax.f32 %v514, %v516
  %519 = vrot.lane.b32.xlu0 %v509, 88
  %v520 = vpop.permute.xlu0 %519
  %v522 = vmax.f32 %v518, %v520
  %523 = vrot.lane.b32.xlu0 %v509, 112
  %v524 = vpop.permute.xlu0 %523
  %v526 = vmax.f32 %v514, %v524
  %v527 = vmax.f32 %v526, %v516
  %v528 = vmax.f32 %v527, %v520
  %529 = vrot.lane.b32.xlu0 %v509, 80
  %v530 = vpop.permute.xlu0 %529
  %v532 = vmax.f32 %v528, %v530
  %533 = vrot.lane.b32.xlu0 %v509, 64
  %v534 = vpop.permute.xlu0 %533
  %v536 = vmax.f32 %v522, %v534
  %537 = vrot.lane.b32.xlu0 %v509, 56
  %v538 = vpop.permute.xlu0 %537
  %v540 = vmax.f32 %v536, %v538
  %v541 = vmax.f32 %v532, %v534
  %v542 = vmax.f32 %v541, %v538
  %543 = vrot.lane.b32.xlu0 %v509, 48
  %v544 = vpop.permute.xlu0 %543
  %v546 = vmax.f32 %v542, %v544
  %548 = vrot.lane.b32.xlu0 %v540, 112
  %v549 = vpop.permute.xlu0 %548
  %552 = vrot.lane.b32.xlu0 %v546, 112
  %v553 = vpop.permute.xlu0 %552
  %vm555 = vcmask 64512
  %v556 = vsel %vm555, %v522, %v532
  %vm557 = vcmask 130048
  %v558 = vsel %vm557, %v556, %v549
  %vm559 = vcmask 195584
  %v560 = vsel %vm559, %v558, %v553
  %v561 = vpack.c.bf16 %v560, %v560
  %v562 = vld [vmem:[%s1 + $0x160] sm:$0xf]
  %v563 = vld [vmem:[%s1 + $0x164] sm:$0xf]
  %v564 = vld [vmem:[%s1 + $0x168] sm:$0xf]
  %v565 = vld [vmem:[%s1 + $0x16c] sm:$0xf]
  %v566 = vld [vmem:[%s2 + $0x1] sm:$0x1]
  %v567 = vlaneseq
  %v568 = vshrl.u32 %v567, 7
  %v569 = vsub.s32 0, %v568
  %v570 = vrot.slane %v566, %v569
  %v575 = vunpack.c.l.b16 %v562
  %v576 = vunpack.c.l.b16 %v563
  %v577 = vunpack.c.l.b16 %v564
  %v578 = vunpack.c.l.b16 %v565
  %v579 = vpack.c.b16 %v576, %v575
  %v580 = vpack.c.b16 %v578, %v577
  %vm583 = vcmask 261120
  %v585 = vsel %vm583, %v561, 0
  %587 = vmatprep.subr.bf16.mxu0 0
  %588 = vmatpush1.bf16.msra.mxu0 0
  %589 = vmatprep.subr.bf16.mxu0 0
  %590 = vmatpush1.bf16.msra.mxu0 0
  %591 = vmatprep.subr.bf16.mxu0 0
  %592 = vmatpush1.bf16.msra.mxu0 0
  %593 = vmatprep.subr.bf16.mxu0 0
  %594 = vmatpush1.bf16.msra.mxu0 0
  %595 = vmatprep.subr.bf16.mxu0 0
  %596 = vmatpush1.bf16.msra.mxu0 0
  %597 = vmatprep.subr.bf16.mxu0 0
  %598 = vmatpush1.bf16.msra.mxu0 0
  %599 = vmatprep.subr.bf16.mxu0 0
  %600 = vmatpush1.bf16.msra.mxu0 %v580
  %601 = vmatprep.subr.bf16.mxu0 0
  %602 = vmatpush1.bf16.msra.mxu0 %v579
  %603 = vmatprep.subr.bf16.mxu0 0
  %604 = vmatpush2.bf16.msra.mxu0 0
  %605 = vmatprep.subr.bf16.mxu0 0
  %606 = vmatpush2.bf16.msra.mxu0 0
  %607 = vmatprep.subr.bf16.mxu0 0
  %608 = vmatpush2.bf16.msra.mxu0 0
  %609 = vmatprep.subr.bf16.mxu0 0
  %610 = vmatpush2.bf16.msra.mxu0 0
  %611 = vmatprep.subr.bf16.mxu0 0
  %612 = vmatpush2.bf16.msra.mxu0 0
  %613 = vmatprep.subr.bf16.mxu0 0
  %614 = vmatpush2.bf16.msra.mxu0 0
  %615 = vmatprep.subr.bf16.mxu0 0
  %616 = vmatpush2.bf16.msra.mxu0 0
  %617 = vmatprep.subr.bf16.mxu0 0
  %618 = vmatpush2.bf16.msra.mxu0 0
  %619 = vmatprep.mubr.bf16.mxu0 0
  %620 = vmatmul.mubr.bf16.gmra.mxu0 %v585
  %v621 = vpop.f32.mrf.mxu0
  %v622 = vadd.f32 %v570, %v621
  %v623 = vpop.f32.mrf.mxu0
  %v624 = vpop.f32.mrf.mxu0
  %v625 = vpop.f32.mrf.mxu0
  %626 = vdwg.mxu0
  %v627 = vmul.f32 %v622, 0.01
  %v628 = vmax.f32 %v622, %v627
  %v629 = vpack.c.bf16 %v628, %v628
  %v630 = vld [vmem:[%s1 + $0x170] sm:$0xf]
  %v631 = vld [vmem:[%s1 + $0x174] sm:$0xf]
  %v632 = vld [vmem:[%s1 + $0x178] sm:$0xf]
  %v633 = vld [vmem:[%s1 + $0x17c] sm:$0xf]
  %v634 = vld [vmem:[%s2 + $0x2] sm:$0x1]
  %v635 = vlaneseq
  %v636 = vshrl.u32 %v635, 7
  %v637 = vsub.s32 0, %v636
  %v638 = vrot.slane %v634, %v637
  %v643 = vunpack.c.l.b16 %v630
  %v644 = vunpack.c.l.b16 %v631
  %v645 = vunpack.c.l.b16 %v632
  %v646 = vunpack.c.l.b16 %v633
  %v647 = vpack.c.b16 %v644, %v643
  %v648 = vpack.c.b16 %v646, %v645
  %v652 = vsel %vm583, %v629, 0
  %654 = vmatprep.subr.bf16.mxu0 0
  %655 = vmatpush1.bf16.msra.mxu0 0
  %656 = vmatprep.subr.bf16.mxu0 0
  %657 = vmatpush1.bf16.msra.mxu0 0
  %658 = vmatprep.subr.bf16.mxu0 0
  %659 = vmatpush1.bf16.msra.mxu0 0
  %660 = vmatprep.subr.bf16.mxu0 0
  %661 = vmatpush1.bf16.msra.mxu0 0
  %662 = vmatprep.subr.bf16.mxu0 0
  %663 = vmatpush1.bf16.msra.mxu0 0
  %664 = vmatprep.subr.bf16.mxu0 0
  %665 = vmatpush1.bf16.msra.mxu0 0
  %666 = vmatprep.subr.bf16.mxu0 0
  %667 = vmatpush1.bf16.msra.mxu0 %v648
  %668 = vmatprep.subr.bf16.mxu0 0
  %669 = vmatpush1.bf16.msra.mxu0 %v647
  %670 = vmatprep.subr.bf16.mxu0 0
  %671 = vmatpush2.bf16.msra.mxu0 0
  %672 = vmatprep.subr.bf16.mxu0 0
  %673 = vmatpush2.bf16.msra.mxu0 0
  %674 = vmatprep.subr.bf16.mxu0 0
  %675 = vmatpush2.bf16.msra.mxu0 0
  %676 = vmatprep.subr.bf16.mxu0 0
  %677 = vmatpush2.bf16.msra.mxu0 0
  %678 = vmatprep.subr.bf16.mxu0 0
  %679 = vmatpush2.bf16.msra.mxu0 0
  %680 = vmatprep.subr.bf16.mxu0 0
  %681 = vmatpush2.bf16.msra.mxu0 0
  %682 = vmatprep.subr.bf16.mxu0 0
  %683 = vmatpush2.bf16.msra.mxu0 0
  %684 = vmatprep.subr.bf16.mxu0 0
  %685 = vmatpush2.bf16.msra.mxu0 0
  %686 = vmatprep.mubr.bf16.mxu0 0
  %687 = vmatmul.mubr.bf16.gmra.mxu0 %v652
  %v688 = vpop.f32.mrf.mxu0
  %v689 = vadd.f32 %v638, %v688
  %v690 = vpop.f32.mrf.mxu0
  %v691 = vpop.f32.mrf.mxu0
  %v692 = vpop.f32.mrf.mxu0
  %693 = vdwg.mxu0
  %v694 = vadd.f32 %v689, %v560
  %v695 = vmul.f32 %v694, 0.01
  %v696 = vmax.f32 %v694, %v695
  %v697 = vpack.c.bf16 %v696, %v696
  %v698 = vld [vmem:[%s1 + $0x180] sm:$0xf]
  %v699 = vld [vmem:[%s1 + $0x184] sm:$0xf]
  %v700 = vld [vmem:[%s1 + $0x188] sm:$0xf]
  %v701 = vld [vmem:[%s1 + $0x18c] sm:$0xf]
  %v702 = vld [vmem:[%s2 + $0x3] sm:$0x1]
  %v703 = vlaneseq
  %v704 = vshrl.u32 %v703, 7
  %v705 = vsub.s32 0, %v704
  %v706 = vrot.slane %v702, %v705
  %v711 = vunpack.c.l.b16 %v698
  %v712 = vunpack.c.l.b16 %v699
  %v713 = vunpack.c.l.b16 %v700
  %v714 = vunpack.c.l.b16 %v701
  %v715 = vpack.c.b16 %v712, %v711
  %v716 = vpack.c.b16 %v714, %v713
  %v720 = vsel %vm583, %v697, 0
  %722 = vmatprep.subr.bf16.mxu0 0
  %723 = vmatpush1.bf16.msra.mxu0 0
  %724 = vmatprep.subr.bf16.mxu0 0
  %725 = vmatpush1.bf16.msra.mxu0 0
  %726 = vmatprep.subr.bf16.mxu0 0
  %727 = vmatpush1.bf16.msra.mxu0 0
  %728 = vmatprep.subr.bf16.mxu0 0
  %729 = vmatpush1.bf16.msra.mxu0 0
  %730 = vmatprep.subr.bf16.mxu0 0
  %731 = vmatpush1.bf16.msra.mxu0 0
  %732 = vmatprep.subr.bf16.mxu0 0
  %733 = vmatpush1.bf16.msra.mxu0 0
  %734 = vmatprep.subr.bf16.mxu0 0
  %735 = vmatpush1.bf16.msra.mxu0 %v716
  %736 = vmatprep.subr.bf16.mxu0 0
  %737 = vmatpush1.bf16.msra.mxu0 %v715
  %738 = vmatprep.subr.bf16.mxu0 0
  %739 = vmatpush2.bf16.msra.mxu0 0
  %740 = vmatprep.subr.bf16.mxu0 0
  %741 = vmatpush2.bf16.msra.mxu0 0
  %742 = vmatprep.subr.bf16.mxu0 0
  %743 = vmatpush2.bf16.msra.mxu0 0
  %744 = vmatprep.subr.bf16.mxu0 0
  %745 = vmatpush2.bf16.msra.mxu0 0
  %746 = vmatprep.subr.bf16.mxu0 0
  %747 = vmatpush2.bf16.msra.mxu0 0
  %748 = vmatprep.subr.bf16.mxu0 0
  %749 = vmatpush2.bf16.msra.mxu0 0
  %750 = vmatprep.subr.bf16.mxu0 0
  %751 = vmatpush2.bf16.msra.mxu0 0
  %752 = vmatprep.subr.bf16.mxu0 0
  %753 = vmatpush2.bf16.msra.mxu0 0
  %754 = vmatprep.mubr.bf16.mxu0 0
  %755 = vmatmul.mubr.bf16.gmra.mxu0 %v720
  %v756 = vpop.f32.mrf.mxu0
  %v757 = vadd.f32 %v706, %v756
  %v758 = vpop.f32.mrf.mxu0
  %v759 = vpop.f32.mrf.mxu0
  %v760 = vpop.f32.mrf.mxu0
  %761 = vdwg.mxu0
  %v762 = vmul.f32 %v757, 0.01
  %v763 = vmax.f32 %v757, %v762
  %v764 = vpack.c.bf16 %v763, %v763
  %v765 = vld [vmem:[%s1 + $0x190] sm:$0xf]
  %v766 = vld [vmem:[%s1 + $0x194] sm:$0xf]
  %v767 = vld [vmem:[%s1 + $0x198] sm:$0xf]
  %v768 = vld [vmem:[%s1 + $0x19c] sm:$0xf]
  %v769 = vld [vmem:[%s2 + $0x4] sm:$0x1]
  %v770 = vlaneseq
  %v771 = vshrl.u32 %v770, 7
  %v772 = vsub.s32 0, %v771
  %v773 = vrot.slane %v769, %v772
  %v778 = vunpack.c.l.b16 %v765
  %v779 = vunpack.c.l.b16 %v766
  %v780 = vunpack.c.l.b16 %v767
  %v781 = vunpack.c.l.b16 %v768
  %v782 = vpack.c.b16 %v779, %v778
  %v783 = vpack.c.b16 %v781, %v780
  %v787 = vsel %vm583, %v764, 0
  %789 = vmatprep.subr.bf16.mxu0 0
  %790 = vmatpush1.bf16.msra.mxu0 0
  %791 = vmatprep.subr.bf16.mxu0 0
  %792 = vmatpush1.bf16.msra.mxu0 0
  %793 = vmatprep.subr.bf16.mxu0 0
  %794 = vmatpush1.bf16.msra.mxu0 0
  %795 = vmatprep.subr.bf16.mxu0 0
  %796 = vmatpush1.bf16.msra.mxu0 0
  %797 = vmatprep.subr.bf16.mxu0 0
  %798 = vmatpush1.bf16.msra.mxu0 0
  %799 = vmatprep.subr.bf16.mxu0 0
  %800 = vmatpush1.bf16.msra.mxu0 0
  %801 = vmatprep.subr.bf16.mxu0 0
  %802 = vmatpush1.bf16.msra.mxu0 %v783
  %803 = vmatprep.subr.bf16.mxu0 0
  %804 = vmatpush1.bf16.msra.mxu0 %v782
  %805 = vmatprep.subr.bf16.mxu0 0
  %806 = vmatpush2.bf16.msra.mxu0 0
  %807 = vmatprep.subr.bf16.mxu0 0
  %808 = vmatpush2.bf16.msra.mxu0 0
  %809 = vmatprep.subr.bf16.mxu0 0
  %810 = vmatpush2.bf16.msra.mxu0 0
  %811 = vmatprep.subr.bf16.mxu0 0
  %812 = vmatpush2.bf16.msra.mxu0 0
  %813 = vmatprep.subr.bf16.mxu0 0
  %814 = vmatpush2.bf16.msra.mxu0 0
  %815 = vmatprep.subr.bf16.mxu0 0
  %816 = vmatpush2.bf16.msra.mxu0 0
  %817 = vmatprep.subr.bf16.mxu0 0
  %818 = vmatpush2.bf16.msra.mxu0 0
  %819 = vmatprep.subr.bf16.mxu0 0
  %820 = vmatpush2.bf16.msra.mxu0 0
  %821 = vmatprep.mubr.bf16.mxu0 0
  %822 = vmatmul.mubr.bf16.gmra.mxu0 %v787
  %v823 = vpop.f32.mrf.mxu0
  %v824 = vadd.f32 %v773, %v823
  %v825 = vpop.f32.mrf.mxu0
  %v826 = vpop.f32.mrf.mxu0
  %v827 = vpop.f32.mrf.mxu0
  %828 = vdwg.mxu0
  %v829 = vadd.f32 %v824, %v696
  %v830 = vmul.f32 %v829, 0.01
  %v831 = vmax.f32 %v829, %v830
  %v832 = vpack.c.bf16 %v831, %v831
  %v833 = vld [vmem:[%s1 + $0x1a0] sm:$0xf]
  %v834 = vld [vmem:[%s1 + $0x1a4] sm:$0xf]
  %v835 = vld [vmem:[%s1 + $0x1a8] sm:$0xf]
  %v836 = vld [vmem:[%s1 + $0x1ac] sm:$0xf]
  %v837 = vld [vmem:[%s2 + $0x5] sm:$0x1]
  %v838 = vlaneseq
  %v839 = vshrl.u32 %v838, 7
  %v840 = vsub.s32 0, %v839
  %v841 = vrot.slane %v837, %v840
  %v846 = vunpack.c.l.b16 %v833
  %v847 = vunpack.c.l.b16 %v834
  %v848 = vunpack.c.l.b16 %v835
  %v849 = vunpack.c.l.b16 %v836
  %v850 = vpack.c.b16 %v847, %v846
  %v851 = vpack.c.b16 %v849, %v848
  %v855 = vsel %vm583, %v832, 0
  %857 = vmatprep.subr.bf16.mxu0 0
  %858 = vmatpush1.bf16.msra.mxu0 0
  %859 = vmatprep.subr.bf16.mxu0 0
  %860 = vmatpush1.bf16.msra.mxu0 0
  %861 = vmatprep.subr.bf16.mxu0 0
  %862 = vmatpush1.bf16.msra.mxu0 0
  %863 = vmatprep.subr.bf16.mxu0 0
  %864 = vmatpush1.bf16.msra.mxu0 0
  %865 = vmatprep.subr.bf16.mxu0 0
  %866 = vmatpush1.bf16.msra.mxu0 0
  %867 = vmatprep.subr.bf16.mxu0 0
  %868 = vmatpush1.bf16.msra.mxu0 0
  %869 = vmatprep.subr.bf16.mxu0 0
  %870 = vmatpush1.bf16.msra.mxu0 %v851
  %871 = vmatprep.subr.bf16.mxu0 0
  %872 = vmatpush1.bf16.msra.mxu0 %v850
  %873 = vmatprep.subr.bf16.mxu0 0
  %874 = vmatpush2.bf16.msra.mxu0 0
  %875 = vmatprep.subr.bf16.mxu0 0
  %876 = vmatpush2.bf16.msra.mxu0 0
  %877 = vmatprep.subr.bf16.mxu0 0
  %878 = vmatpush2.bf16.msra.mxu0 0
  %879 = vmatprep.subr.bf16.mxu0 0
  %880 = vmatpush2.bf16.msra.mxu0 0
  %881 = vmatprep.subr.bf16.mxu0 0
  %882 = vmatpush2.bf16.msra.mxu0 0
  %883 = vmatprep.subr.bf16.mxu0 0
  %884 = vmatpush2.bf16.msra.mxu0 0
  %885 = vmatprep.subr.bf16.mxu0 0
  %886 = vmatpush2.bf16.msra.mxu0 0
  %887 = vmatprep.subr.bf16.mxu0 0
  %888 = vmatpush2.bf16.msra.mxu0 0
  %889 = vmatprep.mubr.bf16.mxu0 0
  %890 = vmatmul.mubr.bf16.gmra.mxu0 %v855
  %v891 = vpop.f32.mrf.mxu0
  %v892 = vadd.f32 %v841, %v891
  %v893 = vpop.f32.mrf.mxu0
  %v894 = vpop.f32.mrf.mxu0
  %v895 = vpop.f32.mrf.mxu0
  %896 = vdwg.mxu0
  %v897 = vmul.f32 %v892, 0.01
  %v898 = vmax.f32 %v892, %v897
  %v899 = vpack.c.bf16 %v898, %v898
  %v900 = vld [vmem:[%s1 + $0x1b0] sm:$0xf]
  %v901 = vld [vmem:[%s1 + $0x1b4] sm:$0xf]
  %v902 = vld [vmem:[%s2 + $0x6] sm:$0x1]
  %v903 = vlaneseq
  %v904 = vshrl.u32 %v903, 7
  %v905 = vsub.s32 0, %v904
  %v906 = vrot.slane %v902, %v905
  %v909 = vunpack.c.l.b16 %v900
  %v910 = vunpack.c.l.b16 %v901
  %v911 = vpack.c.b16 %v910, %v909
  %v914 = vsel %vm557, %v899, 0
  %916 = vmatprep.subr.bf16.mxu0 0
  %917 = vmatpush1.bf16.msra.mxu0 0
  %918 = vmatprep.subr.bf16.mxu0 0
  %919 = vmatpush1.bf16.msra.mxu0 0
  %920 = vmatprep.subr.bf16.mxu0 0
  %921 = vmatpush1.bf16.msra.mxu0 0
  %922 = vmatprep.subr.bf16.mxu0 0
  %923 = vmatpush1.bf16.msra.mxu0 0
  %924 = vmatprep.subr.bf16.mxu0 0
  %925 = vmatpush1.bf16.msra.mxu0 0
  %926 = vmatprep.subr.bf16.mxu0 0
  %927 = vmatpush1.bf16.msra.mxu0 0
  %928 = vmatprep.subr.bf16.mxu0 0
  %929 = vmatpush1.bf16.msra.mxu0 0
  %930 = vmatprep.subr.bf16.mxu0 0
  %931 = vmatpush1.bf16.msra.mxu0 %v911
  %932 = vmatprep.subr.bf16.mxu0 0
  %933 = vmatpush2.bf16.msra.mxu0 0
  %934 = vmatprep.subr.bf16.mxu0 0
  %935 = vmatpush2.bf16.msra.mxu0 0
  %936 = vmatprep.subr.bf16.mxu0 0
  %937 = vmatpush2.bf16.msra.mxu0 0
  %938 = vmatprep.subr.bf16.mxu0 0
  %939 = vmatpush2.bf16.msra.mxu0 0
  %940 = vmatprep.subr.bf16.mxu0 0
  %941 = vmatpush2.bf16.msra.mxu0 0
  %942 = vmatprep.subr.bf16.mxu0 0
  %943 = vmatpush2.bf16.msra.mxu0 0
  %944 = vmatprep.subr.bf16.mxu0 0
  %945 = vmatpush2.bf16.msra.mxu0 0
  %946 = vmatprep.subr.bf16.mxu0 0
  %947 = vmatpush2.bf16.msra.mxu0 0
  %948 = vmatprep.mubr.bf16.mxu0 0
  %949 = vmatmul.mubr.bf16.gmra.mxu0 %v914
  %v950 = vpop.f32.mrf.mxu0
  %v951 = vadd.f32 %v906, %v950
  %v952 = vpop.f32.mrf.mxu0
  %v953 = vpop.f32.mrf.mxu0
  %v954 = vpop.f32.mrf.mxu0
  %955 = vdwg.mxu0
  %v956 = vld [vmem:[%s1 + $0x1b8] sm:$0xf]
  %v957 = vld [vmem:[%s1 + $0x1bc] sm:$0xf]
  %v958 = vld [vmem:[%s1 + $0x1c0] sm:$0xf]
  %v959 = vld [vmem:[%s1 + $0x1c4] sm:$0xf]
  %v960 = vld [vmem:[%s2 + $0x7] sm:$0x1]
  %v961 = vlaneseq
  %v962 = vshrl.u32 %v961, 7
  %v963 = vsub.s32 0, %v962
  %v964 = vrot.slane %v960, %v963
  %v969 = vunpack.c.l.b16 %v956
  %v970 = vunpack.c.l.b16 %v957
  %v971 = vunpack.c.l.b16 %v958
  %v972 = vunpack.c.l.b16 %v959
  %v973 = vpack.c.b16 %v970, %v969
  %v974 = vpack.c.b16 %v972, %v971
  %977 = vmatprep.subr.bf16.mxu0 0
  %978 = vmatpush1.bf16.msra.mxu0 0
  %979 = vmatprep.subr.bf16.mxu0 0
  %980 = vmatpush1.bf16.msra.mxu0 0
  %981 = vmatprep.subr.bf16.mxu0 0
  %982 = vmatpush1.bf16.msra.mxu0 0
  %983 = vmatprep.subr.bf16.mxu0 0
  %984 = vmatpush1.bf16.msra.mxu0 0
  %985 = vmatprep.subr.bf16.mxu0 0
  %986 = vmatpush1.bf16.msra.mxu0 0
  %987 = vmatprep.subr.bf16.mxu0 0
  %988 = vmatpush1.bf16.msra.mxu0 0
  %989 = vmatprep.subr.bf16.mxu0 0
  %990 = vmatpush1.bf16.msra.mxu0 %v974
  %991 = vmatprep.subr.bf16.mxu0 0
  %992 = vmatpush1.bf16.msra.mxu0 %v973
  %993 = vmatprep.subr.bf16.mxu0 0
  %994 = vmatpush2.bf16.msra.mxu0 0
  %995 = vmatprep.subr.bf16.mxu0 0
  %996 = vmatpush2.bf16.msra.mxu0 0
  %997 = vmatprep.subr.bf16.mxu0 0
  %998 = vmatpush2.bf16.msra.mxu0 0
  %999 = vmatprep.subr.bf16.mxu0 0
  %1000 = vmatpush2.bf16.msra.mxu0 0
  %1001 = vmatprep.subr.bf16.mxu0 0
  %1002 = vmatpush2.bf16.msra.mxu0 0
  %1003 = vmatprep.subr.bf16.mxu0 0
  %1004 = vmatpush2.bf16.msra.mxu0 0
  %1005 = vmatprep.subr.bf16.mxu0 0
  %1006 = vmatpush2.bf16.msra.mxu0 0
  %1007 = vmatprep.subr.bf16.mxu0 0
  %1008 = vmatpush2.bf16.msra.mxu0 0
  %1009 = vmatprep.mubr.bf16.mxu0 0
  %1010 = vmatmul.mubr.bf16.gmra.mxu0 %v855
  %v1011 = vpop.f32.mrf.mxu0
  %v1012 = vadd.f32 %v964, %v1011
  %v1013 = vpop.f32.mrf.mxu0
  %v1014 = vpop.f32.mrf.mxu0
  %v1015 = vpop.f32.mrf.mxu0
  %1016 = vdwg.mxu0
  %v1017 = vadd.f32 %v951, %v1012
  %v1018 = vmul.f32 %v1017, 0.01
  %v1019 = vmax.f32 %v1017, %v1018
  %v1020 = vpack.c.bf16 %v1019, %v1019
  %v1021 = vld [vmem:[%s1 + $0x1c8] sm:$0xf]
  %v1022 = vld [vmem:[%s1 + $0x1cc] sm:$0xf]
  %v1023 = vld [vmem:[%s2 + $0x8] sm:$0x1]
  %v1024 = vlaneseq
  %v1025 = vshrl.u32 %v1024, 7
  %v1026 = vsub.s32 0, %v1025
  %v1027 = vrot.slane %v1023, %v1026
  %v1030 = vunpack.c.l.b16 %v1021
  %v1031 = vunpack.c.l.b16 %v1022
  %v1032 = vpack.c.b16 %v1031, %v1030
  %v1035 = vsel %vm557, %v1020, 0
  %1037 = vmatprep.subr.bf16.mxu0 0
  %1038 = vmatpush1.bf16.msra.mxu0 0
  %1039 = vmatprep.subr.bf16.mxu0 0
  %1040 = vmatpush1.bf16.msra.mxu0 0
  %1041 = vmatprep.subr.bf16.mxu0 0
  %1042 = vmatpush1.bf16.msra.mxu0 0
  %1043 = vmatprep.subr.bf16.mxu0 0
  %1044 = vmatpush1.bf16.msra.mxu0 0
  %1045 = vmatprep.subr.bf16.mxu0 0
  %1046 = vmatpush1.bf16.msra.mxu0 0
  %1047 = vmatprep.subr.bf16.mxu0 0
  %1048 = vmatpush1.bf16.msra.mxu0 0
  %1049 = vmatprep.subr.bf16.mxu0 0
  %1050 = vmatpush1.bf16.msra.mxu0 0
  %1051 = vmatprep.subr.bf16.mxu0 0
  %1052 = vmatpush1.bf16.msra.mxu0 %v1032
  %1053 = vmatprep.subr.bf16.mxu0 0
  %1054 = vmatpush2.bf16.msra.mxu0 0
  %1055 = vmatprep.subr.bf16.mxu0 0
  %1056 = vmatpush2.bf16.msra.mxu0 0
  %1057 = vmatprep.subr.bf16.mxu0 0
  %1058 = vmatpush2.bf16.msra.mxu0 0
  %1059 = vmatprep.subr.bf16.mxu0 0
  %1060 = vmatpush2.bf16.msra.mxu0 0
  %1061 = vmatprep.subr.bf16.mxu0 0
  %1062 = vmatpush2.bf16.msra.mxu0 0
  %1063 = vmatprep.subr.bf16.mxu0 0
  %1064 = vmatpush2.bf16.msra.mxu0 0
  %1065 = vmatprep.subr.bf16.mxu0 0
  %1066 = vmatpush2.bf16.msra.mxu0 0
  %1067 = vmatprep.subr.bf16.mxu0 0
  %1068 = vmatpush2.bf16.msra.mxu0 0
  %1069 = vmatprep.mubr.bf16.mxu0 0
  %1070 = vmatmul.mubr.bf16.gmra.mxu0 %v1035
  %v1071 = vpop.f32.mrf.mxu0
  %v1072 = vadd.f32 %v1027, %v1071
  %v1073 = vpop.f32.mrf.mxu0
  %v1074 = vpop.f32.mrf.mxu0
  %v1075 = vpop.f32.mrf.mxu0
  %1076 = vdwg.mxu0
  %v1077 = vmul.f32 %v1072, 0.01
  %v1078 = vmax.f32 %v1072, %v1077
  %v1079 = vpack.c.bf16 %v1078, %v1078
  %v1080 = vld [vmem:[%s1 + $0x1d0] sm:$0xf]
  %v1081 = vld [vmem:[%s1 + $0x1d4] sm:$0xf]
  %v1082 = vld [vmem:[%s2 + $0x9] sm:$0x1]
  %v1083 = vlaneseq
  %v1084 = vshrl.u32 %v1083, 7
  %v1085 = vsub.s32 0, %v1084
  %v1086 = vrot.slane %v1082, %v1085
  %v1089 = vunpack.c.l.b16 %v1080
  %v1090 = vunpack.c.l.b16 %v1081
  %v1091 = vpack.c.b16 %v1090, %v1089
  %v1094 = vsel %vm557, %v1079, 0
  %1096 = vmatprep.subr.bf16.mxu0 0
  %1097 = vmatpush1.bf16.msra.mxu0 0
  %1098 = vmatprep.subr.bf16.mxu0 0
  %1099 = vmatpush1.bf16.msra.mxu0 0
  %1100 = vmatprep.subr.bf16.mxu0 0
  %1101 = vmatpush1.bf16.msra.mxu0 0
  %1102 = vmatprep.subr.bf16.mxu0 0
  %1103 = vmatpush1.bf16.msra.mxu0 0
  %1104 = vmatprep.subr.bf16.mxu0 0
  %1105 = vmatpush1.bf16.msra.mxu0 0
  %1106 = vmatprep.subr.bf16.mxu0 0
  %1107 = vmatpush1.bf16.msra.mxu0 0
  %1108 = vmatprep.subr.bf16.mxu0 0
  %1109 = vmatpush1.bf16.msra.mxu0 0
  %1110 = vmatprep.subr.bf16.mxu0 0
  %1111 = vmatpush1.bf16.msra.mxu0 %v1091
  %1112 = vmatprep.subr.bf16.mxu0 0
  %1113 = vmatpush2.bf16.msra.mxu0 0
  %1114 = vmatprep.subr.bf16.mxu0 0
  %1115 = vmatpush2.bf16.msra.mxu0 0
  %1116 = vmatprep.subr.bf16.mxu0 0
  %1117 = vmatpush2.bf16.msra.mxu0 0
  %1118 = vmatprep.subr.bf16.mxu0 0
  %1119 = vmatpush2.bf16.msra.mxu0 0
  %1120 = vmatprep.subr.bf16.mxu0 0
  %1121 = vmatpush2.bf16.msra.mxu0 0
  %1122 = vmatprep.subr.bf16.mxu0 0
  %1123 = vmatpush2.bf16.msra.mxu0 0
  %1124 = vmatprep.subr.bf16.mxu0 0
  %1125 = vmatpush2.bf16.msra.mxu0 0
  %1126 = vmatprep.subr.bf16.mxu0 0
  %1127 = vmatpush2.bf16.msra.mxu0 0
  %1128 = vmatprep.mubr.bf16.mxu0 0
  %1129 = vmatmul.mubr.bf16.gmra.mxu0 %v1094
  %v1130 = vpop.f32.mrf.mxu0
  %v1131 = vadd.f32 %v1086, %v1130
  %v1132 = vpop.f32.mrf.mxu0
  %v1133 = vpop.f32.mrf.mxu0
  %v1134 = vpop.f32.mrf.mxu0
  %1135 = vdwg.mxu0
  %v1136 = vadd.f32 %v1131, %v1019
  %v1137 = vmul.f32 %v1136, 0.01
  %v1138 = vmax.f32 %v1136, %v1137
  %v1139 = vpack.c.bf16 %v1138, %v1138
  %v1140 = vld [vmem:[%s1 + $0x1d8] sm:$0xf]
  %v1141 = vld [vmem:[%s1 + $0x1dc] sm:$0xf]
  %v1142 = vld [vmem:[%s2 + $0xa] sm:$0x1]
  %v1143 = vlaneseq
  %v1144 = vshrl.u32 %v1143, 7
  %v1145 = vsub.s32 0, %v1144
  %v1146 = vrot.slane %v1142, %v1145
  %v1149 = vunpack.c.l.b16 %v1140
  %v1150 = vunpack.c.l.b16 %v1141
  %v1151 = vpack.c.b16 %v1150, %v1149
  %v1154 = vsel %vm557, %v1139, 0
  %1156 = vmatprep.subr.bf16.mxu0 0
  %1157 = vmatpush1.bf16.msra.mxu0 0
  %1158 = vmatprep.subr.bf16.mxu0 0
  %1159 = vmatpush1.bf16.msra.mxu0 0
  %1160 = vmatprep.subr.bf16.mxu0 0
  %1161 = vmatpush1.bf16.msra.mxu0 0
  %1162 = vmatprep.subr.bf16.mxu0 0
  %1163 = vmatpush1.bf16.msra.mxu0 0
  %1164 = vmatprep.subr.bf16.mxu0 0
  %1165 = vmatpush1.bf16.msra.mxu0 0
  %1166 = vmatprep.subr.bf16.mxu0 0
  %1167 = vmatpush1.bf16.msra.mxu0 0
  %1168 = vmatprep.subr.bf16.mxu0 0
  %1169 = vmatpush1.bf16.msra.mxu0 0
  %1170 = vmatprep.subr.bf16.mxu0 0
  %1171 = vmatpush1.bf16.msra.mxu0 %v1151
  %1172 = vmatprep.subr.bf16.mxu0 0
  %1173 = vmatpush2.bf16.msra.mxu0 0
  %1174 = vmatprep.subr.bf16.mxu0 0
  %1175 = vmatpush2.bf16.msra.mxu0 0
  %1176 = vmatprep.subr.bf16.mxu0 0
  %1177 = vmatpush2.bf16.msra.mxu0 0
  %1178 = vmatprep.subr.bf16.mxu0 0
  %1179 = vmatpush2.bf16.msra.mxu0 0
  %1180 = vmatprep.subr.bf16.mxu0 0
  %1181 = vmatpush2.bf16.msra.mxu0 0
  %1182 = vmatprep.subr.bf16.mxu0 0
  %1183 = vmatpush2.bf16.msra.mxu0 0
  %1184 = vmatprep.subr.bf16.mxu0 0
  %1185 = vmatpush2.bf16.msra.mxu0 0
  %1186 = vmatprep.subr.bf16.mxu0 0
  %1187 = vmatpush2.bf16.msra.mxu0 0
  %1188 = vmatprep.mubr.bf16.mxu0 0
  %1189 = vmatmul.mubr.bf16.gmra.mxu0 %v1154
  %v1190 = vpop.f32.mrf.mxu0
  %v1191 = vadd.f32 %v1146, %v1190
  %v1192 = vpop.f32.mrf.mxu0
  %v1193 = vpop.f32.mrf.mxu0
  %v1194 = vpop.f32.mrf.mxu0
  %1195 = vdwg.mxu0
  %v1196 = vand.u32 2147483647, %v1191
  %v1197 = vadd.f32 %v1196, 1e-06
  %v1198 = vrcp.pop %v1197
  %v1200 = vrot.slane %v1198, 1
  %1201 = vrot.lane.b32.xlu0 %v1200, 8
  %v1202 = vpop.permute.xlu0 %1201
  %v1204 = vrot.slane %v1198, 2
  %1205 = vrot.lane.b32.xlu0 %v1204, 16
  %v1206 = vpop.permute.xlu0 %1205
  %v1208 = vrot.slane %v1198, 3
  %1209 = vrot.lane.b32.xlu0 %v1208, 24
  %v1210 = vpop.permute.xlu0 %1209
  %v1212 = vrot.slane %v1198, 4
  %1213 = vrot.lane.b32.xlu0 %v1212, 32
  %v1214 = vpop.permute.xlu0 %1213
  %v1216 = vrot.slane %v1198, 5
  %1217 = vrot.lane.b32.xlu0 %v1216, 40
  %v1218 = vpop.permute.xlu0 %1217
  %v1220 = vrot.slane %v1198, 6
  %1221 = vrot.lane.b32.xlu0 %v1220, 48
  %v1222 = vpop.permute.xlu0 %1221
  %v1224 = vrot.slane %v1198, 7
  %1225 = vrot.lane.b32.xlu0 %v1224, 56
  %v1226 = vpop.permute.xlu0 %1225
  %v1228 = vsel %vm555, %v1198, %v1202
  %v1229 = vsel %vm557, %v1228, %v1206
  %v1230 = vsel %vm559, %v1229, %v1210
  %v1231 = vsel %vm583, %v1230, %v1214
  %vm1232 = vcmask 326656
  %v1233 = vsel %vm1232, %v1231, %v1218
  %vm1234 = vcmask 392192
  %v1235 = vsel %vm1234, %v1233, %v1222
  %vm1236 = vcmask 457728
  %v1237 = vsel %vm1236, %v1235, %v1226
  %1239 = vrot.lane.b32.xlu0 %v1237, 64
  %v1240 = vpop.permute.xlu0 %1239
  %v1242 = vsel %vm384, %v1237, %v1240
  %v1243 = vlaneseq
  %v1244 = vshrl.u32 %v1243, 7
  %v1245 = vsub.s32 0, %v1244
  %v1246 = vrot.slane %v1242, %v1245
  %v1247 = vmul.f32 %v15, %v1246
  %v1248 = vmul.f32 %v16, %v1246
  %v1249 = vmul.f32 %v17, %v1246
  %v1250 = vmul.f32 %v18, %v1246
  %1251 = vst [vmem:[%s3] sm:$0xff] %v1247
  %1252 = vst [vmem:[%s3 + $0x8] sm:$0xff] %v1248
  %1253 = vst [vmem:[%s3 + $0x10] sm:$0xff] %v1249
  %1254 = vst [vmem:[%s3 + $0x18] sm:$0xff] %v1250
  // Predicated region
  $region14: #{scts_forward.1} parent=0 // pred_check
    _
  $region15: #{scts_forward.1} parent=0 // pred_check_branch
    %1256 = sbr.rel (0) target = $region17
  $region16: #{scts_forward.1} parent=0 // pred_region
    _
  $region17: #{scts_forward.1} parent=0 // pred_fallthru
    _
  // Predicated region
  $region18: #{scts_forward.1} parent=0 // pred_check
    _
  $region19: #{scts_forward.1} parent=0 // pred_check_branch
    %1258 = sbr.rel (0) target = $region21
  $region20: #{scts_forward.1} parent=0 // pred_region
    _
  $region21: #{scts_forward.1} parent=0 // pred_fallthru
    _

</llo_original>
